<compile_context>
chip_gen: v5e
topology: v5e:2x2
jax: 0.10.0
libtpu: 0.0.40
codegen_flags: <defaults>
</compile_context>

<pallas_src>
import functools
import math

import jax
import jax.numpy as jnp
from jax.experimental import pallas as pl
from jax.experimental.pallas import tpu as pltpu

# ----- small synthetic "roberta" config -----
VOCAB = 100
MAX_POS = 64
HIDDEN = 32
N_HEADS = 2
HEAD_DIM = HIDDEN // N_HEADS
FFN = 64
N_LAYERS = 2
N_CLASSES = 2
LN_EPS = 1e-5
ATTN_SCALE = 1.0 / math.sqrt(HEAD_DIM)

MXU_DTYPE = jnp.bfloat16  # matmul operand dtype; accumulation stays f32


# ---------------- in-kernel helpers (f32 vector math) ----------------

def _ln(x, g, b):
    mu = jnp.mean(x, axis=-1, keepdims=True)
    var = jnp.mean(jnp.square(x - mu), axis=-1, keepdims=True)
    return (x - mu) * jax.lax.rsqrt(var + LN_EPS) * g + b


def _gelu(x):
    # TODO(synk): HF RoBERTa default is exact (erf) GELU; tanh approximation used here.
    c = math.sqrt(2.0 / math.pi)
    return 0.5 * x * (1.0 + jnp.tanh(c * (x + 0.044715 * x * x * x)))


def _mm(x, w):
    # bf16 MXU operands, f32 accumulation.
    return jnp.dot(x.astype(MXU_DTYPE), w.astype(MXU_DTYPE),
                   preferred_element_type=jnp.float32)


# ---------------- fully fused model kernel (single invocation, no grid) ----------------

def _model_kernel(emb_ref, mask_ref, eg_ref, eb_ref,
                  wqkv_ref, bqkv_ref, wo_ref, bo_ref, ln1g_ref, ln1b_ref,
                  w1_ref, b1_ref, w2_ref, b2_ref, ln2g_ref, ln2b_ref,
                  clsw_ref, clsb_ref,
                  logits_ref, attn_acc_ref, *, batch, seq):
    """embedding-LN -> N_LAYERS encoder layers (unrolled) -> [CLS] head, all in one body.
    The hidden state is a traced value carried across the unrolled layer loop."""

    # embedding layernorm (no residual)
    x = _ln(emb_ref[...], eg_ref[...], eb_ref[...])                 # (B*S, H) f32

    # per-batch additive mask broadcast to (S, S), hoisted out of ALL loops
    # (JAX does not CSE broadcast_in_dim).
    mask_bb = [jnp.broadcast_to(mask_ref[bi:bi + 1, :], (seq, seq))
               for bi in range(batch)]

    for li in range(N_LAYERS):                                      # unrolled layer loop
        wqkv = wqkv_ref[li]                                         # (H, 3H)  bf16
        wo = wo_ref[li]                                             # (H, H)   bf16
        w1 = w1_ref[li]                                             # (H, F)   bf16
        w2 = w2_ref[li]                                             # (F, H)   bf16

        # ---- fused QKV projection; cast to bf16 once, slice q/k/v from that copy ----
        qkv = _mm(x, wqkv) + bqkv_ref[li]                           # (B*S, 3H) f32
        qkv_b = qkv.astype(MXU_DTYPE)

        # ---- attention: static unroll over (batch, head) -------------------------
        # The output projection is folded per head via linearity:
        #   attn_out[rows_b] = sum_h  softmax(q_h k_h^T + mask) v_h  @  Wo[h_rows, :]
        # Wo row slices at multiples of 16 are sublane-aligned for bf16.
        for bi in range(batch):
            r0 = bi * seq
            acc_b = jnp.zeros((seq, HIDDEN), jnp.float32)
            for hn in range(N_HEADS):
                c0 = hn * HEAD_DIM
                q = qkv_b[r0:r0 + seq, c0:c0 + HEAD_DIM]            # (S, dh) bf16
                k = qkv_b[r0:r0 + seq, HIDDEN + c0:HIDDEN + c0 + HEAD_DIM]
                v = qkv_b[r0:r0 + seq, 2 * HIDDEN + c0:2 * HIDDEN + c0 + HEAD_DIM]
                # ATTN_SCALE is folded into Wq / bq host-side at init.
                s = jax.lax.dot_general(q, k, (((1,), (1,)), ((), ())),
                                        preferred_element_type=jnp.float32)
                s = s + mask_bb[bi]
                s = s - jnp.max(s, axis=-1, keepdims=True)
                p = jnp.exp(s)
                p = p * pl.reciprocal(jnp.sum(p, axis=-1, keepdims=True),
                                      approx=True)
                ctx = jnp.dot(p.astype(MXU_DTYPE), v,
                              preferred_element_type=jnp.float32)    # (S, dh)
                acc_b = acc_b + jnp.dot(ctx.astype(MXU_DTYPE),
                                        wo[c0:c0 + HEAD_DIM, :],
                                        preferred_element_type=jnp.float32)
            # sublane-aligned (r0 is a multiple of 8) store into the VMEM accumulator
            attn_acc_ref[pl.ds(r0, seq), :] = acc_b

        attn_out = attn_acc_ref[...] + bo_ref[li]                   # (B*S, H)
        h1 = _ln(attn_out + x, ln1g_ref[li], ln1b_ref[li])

        # ---- FFN (gelu) + add&norm ----
        ff = _gelu(_mm(h1, w1) + b1_ref[li])
        ff = _mm(ff, w2) + b2_ref[li]
        x = _ln(ff + h1, ln2g_ref[li], ln2b_ref[li])                # carry to next layer

    # ---- fused [CLS] pooling + classifier head ------------------------------------
    # f32 matmul (tiny); only rows 0, S, 2S, ... (the [CLS] rows) are stored.
    logits_all = jnp.dot(x, clsw_ref[...],
                         preferred_element_type=jnp.float32) + clsb_ref[...]
    for bi in range(batch):
        logits_ref[bi:bi + 1, :] = logits_all[bi * seq:bi * seq + 1, :]


def sarcasm_classifier_kernel(emb2d, mask_bias, stacked, emb_ln_g, emb_ln_b,
                              cls_w, cls_b, *, batch, seq):
    rows = batch * seq
    vmem = pl.BlockSpec(memory_space=pltpu.MemorySpace.VMEM)   # whole array, VMEM-resident
    kernel = functools.partial(_model_kernel, batch=batch, seq=seq)
    return pl.pallas_call(
        kernel,
        out_shape=jax.ShapeDtypeStruct((batch, N_CLASSES), jnp.float32),
        in_specs=[vmem] * 18,
        out_specs=vmem,
        scratch_shapes=[pltpu.VMEM((rows, HIDDEN), jnp.float32)],   # attention accumulator
    )(emb2d, mask_bias, emb_ln_g, emb_ln_b,
      stacked["wqkv"], stacked["bqkv"], stacked["wo"], stacked["bo"],
      stacked["ln1_g"], stacked["ln1_b"], stacked["w1"], stacked["b1"],
      stacked["w2"], stacked["b2"], stacked["ln2_g"], stacked["ln2_b"],
      cls_w, cls_b)


# ---------------- parameters (stacked per-layer, biases pre-reshaped) ----------------

def init_params(key):
    def nrm(k, shape, dtype=jnp.float32):
        return (jax.random.normal(k, shape, jnp.float32) * 0.02).astype(dtype)

    keys = iter(jax.random.split(key, 16))
    word_emb = nrm(next(keys), (VOCAB, HIDDEN))
    pos_emb = nrm(next(keys), (MAX_POS, HIDDEN))
    type_emb = nrm(next(keys), (1, HIDDEN))
    cls_w = nrm(next(keys), (HIDDEN, N_CLASSES))     # nn.Linear(hidden, 2), pre-transposed

    # fused QKV weight; attention scale 1/sqrt(dh) folded into the Wq / bq slice
    # host-side so the kernel does no per-head multiply.
    wqkv = jax.random.normal(next(keys), (N_LAYERS, HIDDEN, 3 * HIDDEN),
                             jnp.float32) * 0.02
    wqkv = wqkv.at[:, :, :HIDDEN].multiply(ATTN_SCALE)
    bqkv = jnp.zeros((N_LAYERS, 1, 3 * HIDDEN), jnp.float32)
    bqkv = bqkv.at[:, :, :HIDDEN].multiply(ATTN_SCALE)   # no-op for zeros; kept for generality

    params = {
        "word_emb": word_emb,
        "pos_emb": pos_emb,
        "type_emb": type_emb,
        "emb_ln_g": jnp.ones((1, HIDDEN), jnp.float32),
        "emb_ln_b": jnp.zeros((1, HIDDEN), jnp.float32),
        "cls_w": cls_w,
        "cls_b": jnp.zeros((1, N_CLASSES), jnp.float32),
        "stacked": {
            # matmul weights stored bf16 for the MXU; biases / LN params stay f32
            "wqkv": wqkv.astype(MXU_DTYPE),
            "bqkv": bqkv,
            "wo":   nrm(next(keys), (N_LAYERS, HIDDEN, HIDDEN), MXU_DTYPE),
            "bo":   jnp.zeros((N_LAYERS, 1, HIDDEN), jnp.float32),
            "ln1_g": jnp.ones((N_LAYERS, 1, HIDDEN), jnp.float32),
            "ln1_b": jnp.zeros((N_LAYERS, 1, HIDDEN), jnp.float32),
            "w1":   nrm(next(keys), (N_LAYERS, HIDDEN, FFN), MXU_DTYPE),
            "b1":   jnp.zeros((N_LAYERS, 1, FFN), jnp.float32),
            "w2":   nrm(next(keys), (N_LAYERS, FFN, HIDDEN), MXU_DTYPE),
            "b2":   jnp.zeros((N_LAYERS, 1, HIDDEN), jnp.float32),
            "ln2_g": jnp.ones((N_LAYERS, 1, HIDDEN), jnp.float32),
            "ln2_b": jnp.zeros((N_LAYERS, 1, HIDDEN), jnp.float32),
        },
    }
    return params


# ---------------- forward (SarcasmClassifier.forward) ----------------

def sarcasm_classifier_forward(params, input_ids, attention_mask):
    b, s = input_ids.shape

    # embeddings (token-id gather is plain-JAX glue)
    # TODO(synk): RoBERTa offsets position ids by padding_idx+1; plain arange used here.
    emb = (params["word_emb"][input_ids]
           + params["pos_emb"][:s][None, :, :]
           + params["type_emb"][0][None, None, :])
    mask_bias = (1.0 - attention_mask.astype(jnp.float32)) * -1e9   # (B, S) additive bias

    logits = sarcasm_classifier_kernel(
        emb.reshape(b * s, HIDDEN), mask_bias, params["stacked"],
        params["emb_ln_g"], params["emb_ln_b"],
        params["cls_w"], params["cls_b"], batch=b, seq=s)            # (B, 2)
    return logits


if __name__ == "__main__":
    key = jax.random.PRNGKey(0)
    pkey, dkey = jax.random.split(key)
    params = init_params(pkey)

    B, S = 2, 8
    input_ids = jax.random.randint(dkey, (B, S), 0, VOCAB, dtype=jnp.int32)
    attention_mask = jnp.ones((B, S), jnp.int32).at[1, 6:].set(0)   # some padding on row 1

    logits = jax.jit(sarcasm_classifier_forward)(params, input_ids, attention_mask)
    jax.block_until_ready(logits)
    assert logits.shape == (B, N_CLASSES) and logits.dtype == jnp.float32
    print("KERNEL_OK")
</pallas_src>

<mosaic_0001>
module attributes {stable_mosaic.version = 11 : i64} {
  func.func @_model_kernel(%arg0: memref<16x32xf32, #tpu.memory_space<vmem>>, %arg1: memref<2x8xf32, #tpu.memory_space<vmem>>, %arg2: memref<1x32xf32, #tpu.memory_space<vmem>>, %arg3: memref<1x32xf32, #tpu.memory_space<vmem>>, %arg4: memref<2x32x96xbf16, #tpu.memory_space<vmem>>, %arg5: memref<2x1x96xf32, #tpu.memory_space<vmem>>, %arg6: memref<2x32x32xbf16, #tpu.memory_space<vmem>>, %arg7: memref<2x1x32xf32, #tpu.memory_space<vmem>>, %arg8: memref<2x1x32xf32, #tpu.memory_space<vmem>>, %arg9: memref<2x1x32xf32, #tpu.memory_space<vmem>>, %arg10: memref<2x32x64xbf16, #tpu.memory_space<vmem>>, %arg11: memref<2x1x64xf32, #tpu.memory_space<vmem>>, %arg12: memref<2x64x32xbf16, #tpu.memory_space<vmem>>, %arg13: memref<2x1x32xf32, #tpu.memory_space<vmem>>, %arg14: memref<2x1x32xf32, #tpu.memory_space<vmem>>, %arg15: memref<2x1x32xf32, #tpu.memory_space<vmem>>, %arg16: memref<32x2xf32, #tpu.memory_space<vmem>>, %arg17: memref<1x2xf32, #tpu.memory_space<vmem>>, %arg18: memref<2x2xf32, #tpu.memory_space<vmem>>, %arg19: memref<16x32xf32, #tpu.memory_space<vmem>>) attributes {dimension_semantics = [], scalar_prefetch = 0 : i64, scratch_operands = 1 : i64, tpu.core_type = #tpu.core_type<tc>} {
    %c0 = arith.constant 0 : index
    %c0_0 = arith.constant 0 : index
    %0 = vector.load %arg0[%c0, %c0_0] : memref<16x32xf32, #tpu.memory_space<vmem>>, vector<16x32xf32>
    %c0_1 = arith.constant 0 : index
    %c0_2 = arith.constant 0 : index
    %1 = vector.load %arg2[%c0_1, %c0_2] : memref<1x32xf32, #tpu.memory_space<vmem>>, vector<1x32xf32>
    %c0_3 = arith.constant 0 : index
    %c0_4 = arith.constant 0 : index
    %2 = vector.load %arg3[%c0_3, %c0_4] : memref<1x32xf32, #tpu.memory_space<vmem>>, vector<1x32xf32>
    %cst = arith.constant dense<0.000000e+00> : vector<16xf32>
    %3 = vector.multi_reduction <add>, %0, %cst [1] : vector<16x32xf32> to vector<16xf32>
    %4 = vector.shape_cast %3 : vector<16xf32> to vector<16x1xf32>
    %cst_5 = arith.constant 3.200000e+01 : f32
    %5 = vector.broadcast %cst_5 : f32 to vector<16x1xf32>
    %6 = arith.divf %4, %5 : vector<16x1xf32>
    %7 = vector.broadcast %6 : vector<16x1xf32> to vector<16x32xf32>
    %8 = arith.subf %0, %7 : vector<16x32xf32>
    %9 = arith.mulf %8, %8 : vector<16x32xf32>
    %cst_6 = arith.constant dense<0.000000e+00> : vector<16xf32>
    %10 = vector.multi_reduction <add>, %9, %cst_6 [1] : vector<16x32xf32> to vector<16xf32>
    %11 = vector.shape_cast %10 : vector<16xf32> to vector<16x1xf32>
    %cst_7 = arith.constant 3.200000e+01 : f32
    %12 = vector.broadcast %cst_7 : f32 to vector<16x1xf32>
    %13 = arith.divf %11, %12 : vector<16x1xf32>
    %14 = vector.broadcast %6 : vector<16x1xf32> to vector<16x32xf32>
    %15 = arith.subf %0, %14 : vector<16x32xf32>
    %cst_8 = arith.constant 9.99999974E-6 : f32
    %16 = vector.broadcast %cst_8 : f32 to vector<16x1xf32>
    %17 = arith.addf %13, %16 : vector<16x1xf32>
    %18 = math.rsqrt %17 : vector<16x1xf32>
    %19 = vector.broadcast %18 : vector<16x1xf32> to vector<16x32xf32>
    %20 = arith.mulf %15, %19 : vector<16x32xf32>
    %21 = vector.broadcast %1 : vector<1x32xf32> to vector<16x32xf32>
    %22 = arith.mulf %20, %21 : vector<16x32xf32>
    %23 = vector.broadcast %2 : vector<1x32xf32> to vector<16x32xf32>
    %24 = arith.addf %22, %23 : vector<16x32xf32>
    %c0_9 = arith.constant 0 : index
    %c0_10 = arith.constant 0 : index
    %25 = vector.load %arg1[%c0_9, %c0_10] : memref<2x8xf32, #tpu.memory_space<vmem>>, vector<1x8xf32>
    %26 = vector.shape_cast %25 : vector<1x8xf32> to vector<1x8xf32>
    %27 = vector.broadcast %26 : vector<1x8xf32> to vector<8x8xf32>
    %c1 = arith.constant 1 : index
    %c0_11 = arith.constant 0 : index
    %28 = vector.load %arg1[%c1, %c0_11] : memref<2x8xf32, #tpu.memory_space<vmem>>, vector<1x8xf32>
    %29 = vector.shape_cast %28 : vector<1x8xf32> to vector<1x8xf32>
    %30 = vector.broadcast %29 : vector<1x8xf32> to vector<8x8xf32>
    %c0_12 = arith.constant 0 : index
    %c0_13 = arith.constant 0 : index
    %c0_14 = arith.constant 0 : index
    %31 = vector.load %arg4[%c0_12, %c0_13, %c0_14] : memref<2x32x96xbf16, #tpu.memory_space<vmem>>, vector<1x32x96xbf16>
    %32 = vector.shape_cast %31 : vector<1x32x96xbf16> to vector<32x96xbf16>
    %c0_15 = arith.constant 0 : index
    %c0_16 = arith.constant 0 : index
    %c0_17 = arith.constant 0 : index
    %33 = vector.load %arg6[%c0_15, %c0_16, %c0_17] : memref<2x32x32xbf16, #tpu.memory_space<vmem>>, vector<1x32x32xbf16>
    %34 = vector.shape_cast %33 : vector<1x32x32xbf16> to vector<32x32xbf16>
    %c0_18 = arith.constant 0 : index
    %c0_19 = arith.constant 0 : index
    %c0_20 = arith.constant 0 : index
    %35 = vector.load %arg10[%c0_18, %c0_19, %c0_20] : memref<2x32x64xbf16, #tpu.memory_space<vmem>>, vector<1x32x64xbf16>
    %36 = vector.shape_cast %35 : vector<1x32x64xbf16> to vector<32x64xbf16>
    %c0_21 = arith.constant 0 : index
    %c0_22 = arith.constant 0 : index
    %c0_23 = arith.constant 0 : index
    %37 = vector.load %arg12[%c0_21, %c0_22, %c0_23] : memref<2x64x32xbf16, #tpu.memory_space<vmem>>, vector<1x64x32xbf16>
    %38 = vector.shape_cast %37 : vector<1x64x32xbf16> to vector<64x32xbf16>
    %39 = arith.truncf %24 : vector<16x32xf32> to vector<16x32xbf16>
    %cst_24 = arith.constant dense<0.000000e+00> : vector<16x96xf32>
    %40 = tpu.matmul %39, %32, %cst_24 {dimension_numbers = #tpu.dot_dimension_numbers<[1], [0], [0], [1], [0, 0, 1, 1], [], []>} : vector<16x32xbf16>, vector<32x96xbf16>, vector<16x96xf32> -> vector<16x96xf32>
    %c0_25 = arith.constant 0 : index
    %c0_26 = arith.constant 0 : index
    %c0_27 = arith.constant 0 : index
    %41 = vector.load %arg5[%c0_25, %c0_26, %c0_27] : memref<2x1x96xf32, #tpu.memory_space<vmem>>, vector<1x1x96xf32>
    %42 = vector.shape_cast %41 : vector<1x1x96xf32> to vector<1x96xf32>
    %43 = vector.broadcast %42 : vector<1x96xf32> to vector<16x96xf32>
    %44 = arith.addf %40, %43 : vector<16x96xf32>
    %45 = arith.truncf %44 : vector<16x96xf32> to vector<16x96xbf16>
    %cst_28 = arith.constant 0.000000e+00 : f32
    %46 = vector.broadcast %cst_28 : f32 to vector<8x32xf32>
    %47 = vector.extract_strided_slice %45 {offsets = [0, 0], sizes = [8, 16], strides = [1, 1]} : vector<16x96xbf16> to vector<8x16xbf16>
    %48 = vector.extract_strided_slice %45 {offsets = [0, 32], sizes = [8, 16], strides = [1, 1]} : vector<16x96xbf16> to vector<8x16xbf16>
    %49 = vector.extract_strided_slice %45 {offsets = [0, 64], sizes = [8, 16], strides = [1, 1]} : vector<16x96xbf16> to vector<8x16xbf16>
    %cst_29 = arith.constant dense<0.000000e+00> : vector<8x8xf32>
    %50 = tpu.matmul %47, %48, %cst_29 {dimension_numbers = #tpu.dot_dimension_numbers<[1], [1], [0], [0], [0, 0, 1, 0], [], []>} : vector<8x16xbf16>, vector<8x16xbf16>, vector<8x8xf32> -> vector<8x8xf32>
    %51 = arith.addf %50, %27 : vector<8x8xf32>
    %cst_30 = arith.constant dense<0xFF800000> : vector<8xf32>
    %52 = vector.multi_reduction <maximumf>, %51, %cst_30 [1] : vector<8x8xf32> to vector<8xf32>
    %53 = vector.shape_cast %52 : vector<8xf32> to vector<8x1xf32>
    %54 = vector.broadcast %53 : vector<8x1xf32> to vector<8x8xf32>
    %55 = arith.subf %51, %54 : vector<8x8xf32>
    %56 = math.exp %55 : vector<8x8xf32>
    %cst_31 = arith.constant dense<0.000000e+00> : vector<8xf32>
    %57 = vector.multi_reduction <add>, %56, %cst_31 [1] : vector<8x8xf32> to vector<8xf32>
    %58 = vector.shape_cast %57 : vector<8xf32> to vector<8x1xf32>
    %59 = tpu.reciprocal %58 {approx = true} : vector<8x1xf32> -> vector<8x1xf32>
    %60 = vector.broadcast %59 : vector<8x1xf32> to vector<8x8xf32>
    %61 = arith.mulf %56, %60 : vector<8x8xf32>
    %62 = arith.truncf %61 : vector<8x8xf32> to vector<8x8xbf16>
    %cst_32 = arith.constant dense<0.000000e+00> : vector<8x16xf32>
    %63 = tpu.matmul %62, %49, %cst_32 {dimension_numbers = #tpu.dot_dimension_numbers<[1], [0], [0], [1], [0, 0, 1, 1], [], []>} : vector<8x8xbf16>, vector<8x16xbf16>, vector<8x16xf32> -> vector<8x16xf32>
    %64 = arith.truncf %63 : vector<8x16xf32> to vector<8x16xbf16>
    %65 = vector.extract_strided_slice %34 {offsets = [0, 0], sizes = [16, 32], strides = [1, 1]} : vector<32x32xbf16> to vector<16x32xbf16>
    %cst_33 = arith.constant dense<0.000000e+00> : vector<8x32xf32>
    %66 = tpu.matmul %64, %65, %cst_33 {dimension_numbers = #tpu.dot_dimension_numbers<[1], [0], [0], [1], [0, 0, 1, 1], [], []>} : vector<8x16xbf16>, vector<16x32xbf16>, vector<8x32xf32> -> vector<8x32xf32>
    %67 = arith.addf %46, %66 : vector<8x32xf32>
    %68 = vector.extract_strided_slice %45 {offsets = [0, 16], sizes = [8, 16], strides = [1, 1]} : vector<16x96xbf16> to vector<8x16xbf16>
    %69 = vector.extract_strided_slice %45 {offsets = [0, 48], sizes = [8, 16], strides = [1, 1]} : vector<16x96xbf16> to vector<8x16xbf16>
    %70 = vector.extract_strided_slice %45 {offsets = [0, 80], sizes = [8, 16], strides = [1, 1]} : vector<16x96xbf16> to vector<8x16xbf16>
    %cst_34 = arith.constant dense<0.000000e+00> : vector<8x8xf32>
    %71 = tpu.matmul %68, %69, %cst_34 {dimension_numbers = #tpu.dot_dimension_numbers<[1], [1], [0], [0], [0, 0, 1, 0], [], []>} : vector<8x16xbf16>, vector<8x16xbf16>, vector<8x8xf32> -> vector<8x8xf32>
    %72 = arith.addf %71, %27 : vector<8x8xf32>
    %cst_35 = arith.constant dense<0xFF800000> : vector<8xf32>
    %73 = vector.multi_reduction <maximumf>, %72, %cst_35 [1] : vector<8x8xf32> to vector<8xf32>
    %74 = vector.shape_cast %73 : vector<8xf32> to vector<8x1xf32>
    %75 = vector.broadcast %74 : vector<8x1xf32> to vector<8x8xf32>
    %76 = arith.subf %72, %75 : vector<8x8xf32>
    %77 = math.exp %76 : vector<8x8xf32>
    %cst_36 = arith.constant dense<0.000000e+00> : vector<8xf32>
    %78 = vector.multi_reduction <add>, %77, %cst_36 [1] : vector<8x8xf32> to vector<8xf32>
    %79 = vector.shape_cast %78 : vector<8xf32> to vector<8x1xf32>
    %80 = tpu.reciprocal %79 {approx = true} : vector<8x1xf32> -> vector<8x1xf32>
    %81 = vector.broadcast %80 : vector<8x1xf32> to vector<8x8xf32>
    %82 = arith.mulf %77, %81 : vector<8x8xf32>
    %83 = arith.truncf %82 : vector<8x8xf32> to vector<8x8xbf16>
    %cst_37 = arith.constant dense<0.000000e+00> : vector<8x16xf32>
    %84 = tpu.matmul %83, %70, %cst_37 {dimension_numbers = #tpu.dot_dimension_numbers<[1], [0], [0], [1], [0, 0, 1, 1], [], []>} : vector<8x8xbf16>, vector<8x16xbf16>, vector<8x16xf32> -> vector<8x16xf32>
    %85 = arith.truncf %84 : vector<8x16xf32> to vector<8x16xbf16>
    %86 = vector.extract_strided_slice %34 {offsets = [16, 0], sizes = [16, 32], strides = [1, 1]} : vector<32x32xbf16> to vector<16x32xbf16>
    %cst_38 = arith.constant dense<0.000000e+00> : vector<8x32xf32>
    %87 = tpu.matmul %85, %86, %cst_38 {dimension_numbers = #tpu.dot_dimension_numbers<[1], [0], [0], [1], [0, 0, 1, 1], [], []>} : vector<8x16xbf16>, vector<16x32xbf16>, vector<8x32xf32> -> vector<8x32xf32>
    %88 = arith.addf %67, %87 : vector<8x32xf32>
    %c0_39 = arith.constant 0 : index
    %c0_40 = arith.constant 0 : index
    %89 = vector.load %arg19[%c0_39, %c0_40] : memref<16x32xf32, #tpu.memory_space<vmem>>, vector<8x32xf32>
    tpu.vector_store %arg19[%c0_39, %c0_40], %88 {strides = array<i32>} : memref<16x32xf32, #tpu.memory_space<vmem>>, vector<8x32xf32>,
    %cst_41 = arith.constant 0.000000e+00 : f32
    %90 = vector.broadcast %cst_41 : f32 to vector<8x32xf32>
    %91 = vector.extract_strided_slice %45 {offsets = [8, 0], sizes = [8, 16], strides = [1, 1]} : vector<16x96xbf16> to vector<8x16xbf16>
    %92 = vector.extract_strided_slice %45 {offsets = [8, 32], sizes = [8, 16], strides = [1, 1]} : vector<16x96xbf16> to vector<8x16xbf16>
    %93 = vector.extract_strided_slice %45 {offsets = [8, 64], sizes = [8, 16], strides = [1, 1]} : vector<16x96xbf16> to vector<8x16xbf16>
    %cst_42 = arith.constant dense<0.000000e+00> : vector<8x8xf32>
    %94 = tpu.matmul %91, %92, %cst_42 {dimension_numbers = #tpu.dot_dimension_numbers<[1], [1], [0], [0], [0, 0, 1, 0], [], []>} : vector<8x16xbf16>, vector<8x16xbf16>, vector<8x8xf32> -> vector<8x8xf32>
    %95 = arith.addf %94, %30 : vector<8x8xf32>
    %cst_43 = arith.constant dense<0xFF800000> : vector<8xf32>
    %96 = vector.multi_reduction <maximumf>, %95, %cst_43 [1] : vector<8x8xf32> to vector<8xf32>
    %97 = vector.shape_cast %96 : vector<8xf32> to vector<8x1xf32>
    %98 = vector.broadcast %97 : vector<8x1xf32> to vector<8x8xf32>
    %99 = arith.subf %95, %98 : vector<8x8xf32>
    %100 = math.exp %99 : vector<8x8xf32>
    %cst_44 = arith.constant dense<0.000000e+00> : vector<8xf32>
    %101 = vector.multi_reduction <add>, %100, %cst_44 [1] : vector<8x8xf32> to vector<8xf32>
    %102 = vector.shape_cast %101 : vector<8xf32> to vector<8x1xf32>
    %103 = tpu.reciprocal %102 {approx = true} : vector<8x1xf32> -> vector<8x1xf32>
    %104 = vector.broadcast %103 : vector<8x1xf32> to vector<8x8xf32>
    %105 = arith.mulf %100, %104 : vector<8x8xf32>
    %106 = arith.truncf %105 : vector<8x8xf32> to vector<8x8xbf16>
    %cst_45 = arith.constant dense<0.000000e+00> : vector<8x16xf32>
    %107 = tpu.matmul %106, %93, %cst_45 {dimension_numbers = #tpu.dot_dimension_numbers<[1], [0], [0], [1], [0, 0, 1, 1], [], []>} : vector<8x8xbf16>, vector<8x16xbf16>, vector<8x16xf32> -> vector<8x16xf32>
    %108 = arith.truncf %107 : vector<8x16xf32> to vector<8x16xbf16>
    %109 = vector.extract_strided_slice %34 {offsets = [0, 0], sizes = [16, 32], strides = [1, 1]} : vector<32x32xbf16> to vector<16x32xbf16>
    %cst_46 = arith.constant dense<0.000000e+00> : vector<8x32xf32>
    %110 = tpu.matmul %108, %109, %cst_46 {dimension_numbers = #tpu.dot_dimension_numbers<[1], [0], [0], [1], [0, 0, 1, 1], [], []>} : vector<8x16xbf16>, vector<16x32xbf16>, vector<8x32xf32> -> vector<8x32xf32>
    %111 = arith.addf %90, %110 : vector<8x32xf32>
    %112 = vector.extract_strided_slice %45 {offsets = [8, 16], sizes = [8, 16], strides = [1, 1]} : vector<16x96xbf16> to vector<8x16xbf16>
    %113 = vector.extract_strided_slice %45 {offsets = [8, 48], sizes = [8, 16], strides = [1, 1]} : vector<16x96xbf16> to vector<8x16xbf16>
    %114 = vector.extract_strided_slice %45 {offsets = [8, 80], sizes = [8, 16], strides = [1, 1]} : vector<16x96xbf16> to vector<8x16xbf16>
    %cst_47 = arith.constant dense<0.000000e+00> : vector<8x8xf32>
    %115 = tpu.matmul %112, %113, %cst_47 {dimension_numbers = #tpu.dot_dimension_numbers<[1], [1], [0], [0], [0, 0, 1, 0], [], []>} : vector<8x16xbf16>, vector<8x16xbf16>, vector<8x8xf32> -> vector<8x8xf32>
    %116 = arith.addf %115, %30 : vector<8x8xf32>
    %cst_48 = arith.constant dense<0xFF800000> : vector<8xf32>
    %117 = vector.multi_reduction <maximumf>, %116, %cst_48 [1] : vector<8x8xf32> to vector<8xf32>
    %118 = vector.shape_cast %117 : vector<8xf32> to vector<8x1xf32>
    %119 = vector.broadcast %118 : vector<8x1xf32> to vector<8x8xf32>
    %120 = arith.subf %116, %119 : vector<8x8xf32>
    %121 = math.exp %120 : vector<8x8xf32>
    %cst_49 = arith.constant dense<0.000000e+00> : vector<8xf32>
    %122 = vector.multi_reduction <add>, %121, %cst_49 [1] : vector<8x8xf32> to vector<8xf32>
    %123 = vector.shape_cast %122 : vector<8xf32> to vector<8x1xf32>
    %124 = tpu.reciprocal %123 {approx = true} : vector<8x1xf32> -> vector<8x1xf32>
    %125 = vector.broadcast %124 : vector<8x1xf32> to vector<8x8xf32>
    %126 = arith.mulf %121, %125 : vector<8x8xf32>
    %127 = arith.truncf %126 : vector<8x8xf32> to vector<8x8xbf16>
    %cst_50 = arith.constant dense<0.000000e+00> : vector<8x16xf32>
    %128 = tpu.matmul %127, %114, %cst_50 {dimension_numbers = #tpu.dot_dimension_numbers<[1], [0], [0], [1], [0, 0, 1, 1], [], []>} : vector<8x8xbf16>, vector<8x16xbf16>, vector<8x16xf32> -> vector<8x16xf32>
    %129 = arith.truncf %128 : vector<8x16xf32> to vector<8x16xbf16>
    %130 = vector.extract_strided_slice %34 {offsets = [16, 0], sizes = [16, 32], strides = [1, 1]} : vector<32x32xbf16> to vector<16x32xbf16>
    %cst_51 = arith.constant dense<0.000000e+00> : vector<8x32xf32>
    %131 = tpu.matmul %129, %130, %cst_51 {dimension_numbers = #tpu.dot_dimension_numbers<[1], [0], [0], [1], [0, 0, 1, 1], [], []>} : vector<8x16xbf16>, vector<16x32xbf16>, vector<8x32xf32> -> vector<8x32xf32>
    %132 = arith.addf %111, %131 : vector<8x32xf32>
    %c8 = arith.constant 8 : index
    %c0_52 = arith.constant 0 : index
    %133 = vector.load %arg19[%c8, %c0_52] : memref<16x32xf32, #tpu.memory_space<vmem>>, vector<8x32xf32>
    tpu.vector_store %arg19[%c8, %c0_52], %132 {strides = array<i32>} : memref<16x32xf32, #tpu.memory_space<vmem>>, vector<8x32xf32>,
    %c0_53 = arith.constant 0 : index
    %c0_54 = arith.constant 0 : index
    %134 = vector.load %arg19[%c0_53, %c0_54] : memref<16x32xf32, #tpu.memory_space<vmem>>, vector<16x32xf32>
    %c0_55 = arith.constant 0 : index
    %c0_56 = arith.constant 0 : index
    %c0_57 = arith.constant 0 : index
    %135 = vector.load %arg7[%c0_55, %c0_56, %c0_57] : memref<2x1x32xf32, #tpu.memory_space<vmem>>, vector<1x1x32xf32>
    %136 = vector.shape_cast %135 : vector<1x1x32xf32> to vector<1x32xf32>
    %137 = vector.broadcast %136 : vector<1x32xf32> to vector<16x32xf32>
    %138 = arith.addf %134, %137 : vector<16x32xf32>
    %139 = arith.addf %138, %24 : vector<16x32xf32>
    %c0_58 = arith.constant 0 : index
    %c0_59 = arith.constant 0 : index
    %c0_60 = arith.constant 0 : index
    %140 = vector.load %arg8[%c0_58, %c0_59, %c0_60] : memref<2x1x32xf32, #tpu.memory_space<vmem>>, vector<1x1x32xf32>
    %141 = vector.shape_cast %140 : vector<1x1x32xf32> to vector<1x32xf32>
    %c0_61 = arith.constant 0 : index
    %c0_62 = arith.constant 0 : index
    %c0_63 = arith.constant 0 : index
    %142 = vector.load %arg9[%c0_61, %c0_62, %c0_63] : memref<2x1x32xf32, #tpu.memory_space<vmem>>, vector<1x1x32xf32>
    %143 = vector.shape_cast %142 : vector<1x1x32xf32> to vector<1x32xf32>
    %cst_64 = arith.constant dense<0.000000e+00> : vector<16xf32>
    %144 = vector.multi_reduction <add>, %139, %cst_64 [1] : vector<16x32xf32> to vector<16xf32>
    %145 = vector.shape_cast %144 : vector<16xf32> to vector<16x1xf32>
    %cst_65 = arith.constant 3.200000e+01 : f32
    %146 = vector.broadcast %cst_65 : f32 to vector<16x1xf32>
    %147 = arith.divf %145, %146 : vector<16x1xf32>
    %148 = vector.broadcast %147 : vector<16x1xf32> to vector<16x32xf32>
    %149 = arith.subf %139, %148 : vector<16x32xf32>
    %150 = arith.mulf %149, %149 : vector<16x32xf32>
    %cst_66 = arith.constant dense<0.000000e+00> : vector<16xf32>
    %151 = vector.multi_reduction <add>, %150, %cst_66 [1] : vector<16x32xf32> to vector<16xf32>
    %152 = vector.shape_cast %151 : vector<16xf32> to vector<16x1xf32>
    %cst_67 = arith.constant 3.200000e+01 : f32
    %153 = vector.broadcast %cst_67 : f32 to vector<16x1xf32>
    %154 = arith.divf %152, %153 : vector<16x1xf32>
    %155 = vector.broadcast %147 : vector<16x1xf32> to vector<16x32xf32>
    %156 = arith.subf %139, %155 : vector<16x32xf32>
    %cst_68 = arith.constant 9.99999974E-6 : f32
    %157 = vector.broadcast %cst_68 : f32 to vector<16x1xf32>
    %158 = arith.addf %154, %157 : vector<16x1xf32>
    %159 = math.rsqrt %158 : vector<16x1xf32>
    %160 = vector.broadcast %159 : vector<16x1xf32> to vector<16x32xf32>
    %161 = arith.mulf %156, %160 : vector<16x32xf32>
    %162 = vector.broadcast %141 : vector<1x32xf32> to vector<16x32xf32>
    %163 = arith.mulf %161, %162 : vector<16x32xf32>
    %164 = vector.broadcast %143 : vector<1x32xf32> to vector<16x32xf32>
    %165 = arith.addf %163, %164 : vector<16x32xf32>
    %166 = arith.truncf %165 : vector<16x32xf32> to vector<16x32xbf16>
    %cst_69 = arith.constant dense<0.000000e+00> : vector<16x64xf32>
    %167 = tpu.matmul %166, %36, %cst_69 {dimension_numbers = #tpu.dot_dimension_numbers<[1], [0], [0], [1], [0, 0, 1, 1], [], []>} : vector<16x32xbf16>, vector<32x64xbf16>, vector<16x64xf32> -> vector<16x64xf32>
    %c0_70 = arith.constant 0 : index
    %c0_71 = arith.constant 0 : index
    %c0_72 = arith.constant 0 : index
    %168 = vector.load %arg11[%c0_70, %c0_71, %c0_72] : memref<2x1x64xf32, #tpu.memory_space<vmem>>, vector<1x1x64xf32>
    %169 = vector.shape_cast %168 : vector<1x1x64xf32> to vector<1x64xf32>
    %170 = vector.broadcast %169 : vector<1x64xf32> to vector<16x64xf32>
    %171 = arith.addf %167, %170 : vector<16x64xf32>
    %cst_73 = arith.constant 5.000000e-01 : f32
    %172 = vector.broadcast %cst_73 : f32 to vector<16x64xf32>
    %173 = arith.mulf %172, %171 : vector<16x64xf32>
    %cst_74 = arith.constant 4.471500e-02 : f32
    %174 = vector.broadcast %cst_74 : f32 to vector<16x64xf32>
    %175 = arith.mulf %174, %171 : vector<16x64xf32>
    %176 = arith.mulf %175, %171 : vector<16x64xf32>
    %177 = arith.mulf %176, %171 : vector<16x64xf32>
    %178 = arith.addf %171, %177 : vector<16x64xf32>
    %cst_75 = arith.constant 0.797884583 : f32
    %179 = vector.broadcast %cst_75 : f32 to vector<16x64xf32>
    %180 = arith.mulf %179, %178 : vector<16x64xf32>
    %181 = math.tanh %180 : vector<16x64xf32>
    %cst_76 = arith.constant 1.000000e+00 : f32
    %182 = vector.broadcast %cst_76 : f32 to vector<16x64xf32>
    %183 = arith.addf %182, %181 : vector<16x64xf32>
    %184 = arith.mulf %173, %183 : vector<16x64xf32>
    %185 = arith.truncf %184 : vector<16x64xf32> to vector<16x64xbf16>
    %cst_77 = arith.constant dense<0.000000e+00> : vector<16x32xf32>
    %186 = tpu.matmul %185, %38, %cst_77 {dimension_numbers = #tpu.dot_dimension_numbers<[1], [0], [0], [1], [0, 0, 1, 1], [], []>} : vector<16x64xbf16>, vector<64x32xbf16>, vector<16x32xf32> -> vector<16x32xf32>
    %c0_78 = arith.constant 0 : index
    %c0_79 = arith.constant 0 : index
    %c0_80 = arith.constant 0 : index
    %187 = vector.load %arg13[%c0_78, %c0_79, %c0_80] : memref<2x1x32xf32, #tpu.memory_space<vmem>>, vector<1x1x32xf32>
    %188 = vector.shape_cast %187 : vector<1x1x32xf32> to vector<1x32xf32>
    %189 = vector.broadcast %188 : vector<1x32xf32> to vector<16x32xf32>
    %190 = arith.addf %186, %189 : vector<16x32xf32>
    %191 = arith.addf %190, %165 : vector<16x32xf32>
    %c0_81 = arith.constant 0 : index
    %c0_82 = arith.constant 0 : index
    %c0_83 = arith.constant 0 : index
    %192 = vector.load %arg14[%c0_81, %c0_82, %c0_83] : memref<2x1x32xf32, #tpu.memory_space<vmem>>, vector<1x1x32xf32>
    %193 = vector.shape_cast %192 : vector<1x1x32xf32> to vector<1x32xf32>
    %c0_84 = arith.constant 0 : index
    %c0_85 = arith.constant 0 : index
    %c0_86 = arith.constant 0 : index
    %194 = vector.load %arg15[%c0_84, %c0_85, %c0_86] : memref<2x1x32xf32, #tpu.memory_space<vmem>>, vector<1x1x32xf32>
    %195 = vector.shape_cast %194 : vector<1x1x32xf32> to vector<1x32xf32>
    %cst_87 = arith.constant dense<0.000000e+00> : vector<16xf32>
    %196 = vector.multi_reduction <add>, %191, %cst_87 [1] : vector<16x32xf32> to vector<16xf32>
    %197 = vector.shape_cast %196 : vector<16xf32> to vector<16x1xf32>
    %cst_88 = arith.constant 3.200000e+01 : f32
    %198 = vector.broadcast %cst_88 : f32 to vector<16x1xf32>
    %199 = arith.divf %197, %198 : vector<16x1xf32>
    %200 = vector.broadcast %199 : vector<16x1xf32> to vector<16x32xf32>
    %201 = arith.subf %191, %200 : vector<16x32xf32>
    %202 = arith.mulf %201, %201 : vector<16x32xf32>
    %cst_89 = arith.constant dense<0.000000e+00> : vector<16xf32>
    %203 = vector.multi_reduction <add>, %202, %cst_89 [1] : vector<16x32xf32> to vector<16xf32>
    %204 = vector.shape_cast %203 : vector<16xf32> to vector<16x1xf32>
    %cst_90 = arith.constant 3.200000e+01 : f32
    %205 = vector.broadcast %cst_90 : f32 to vector<16x1xf32>
    %206 = arith.divf %204, %205 : vector<16x1xf32>
    %207 = vector.broadcast %199 : vector<16x1xf32> to vector<16x32xf32>
    %208 = arith.subf %191, %207 : vector<16x32xf32>
    %cst_91 = arith.constant 9.99999974E-6 : f32
    %209 = vector.broadcast %cst_91 : f32 to vector<16x1xf32>
    %210 = arith.addf %206, %209 : vector<16x1xf32>
    %211 = math.rsqrt %210 : vector<16x1xf32>
    %212 = vector.broadcast %211 : vector<16x1xf32> to vector<16x32xf32>
    %213 = arith.mulf %208, %212 : vector<16x32xf32>
    %214 = vector.broadcast %193 : vector<1x32xf32> to vector<16x32xf32>
    %215 = arith.mulf %213, %214 : vector<16x32xf32>
    %216 = vector.broadcast %195 : vector<1x32xf32> to vector<16x32xf32>
    %217 = arith.addf %215, %216 : vector<16x32xf32>
    %c1_92 = arith.constant 1 : index
    %c0_93 = arith.constant 0 : index
    %c0_94 = arith.constant 0 : index
    %218 = vector.load %arg4[%c1_92, %c0_93, %c0_94] : memref<2x32x96xbf16, #tpu.memory_space<vmem>>, vector<1x32x96xbf16>
    %219 = vector.shape_cast %218 : vector<1x32x96xbf16> to vector<32x96xbf16>
    %c1_95 = arith.constant 1 : index
    %c0_96 = arith.constant 0 : index
    %c0_97 = arith.constant 0 : index
    %220 = vector.load %arg6[%c1_95, %c0_96, %c0_97] : memref<2x32x32xbf16, #tpu.memory_space<vmem>>, vector<1x32x32xbf16>
    %221 = vector.shape_cast %220 : vector<1x32x32xbf16> to vector<32x32xbf16>
    %c1_98 = arith.constant 1 : index
    %c0_99 = arith.constant 0 : index
    %c0_100 = arith.constant 0 : index
    %222 = vector.load %arg10[%c1_98, %c0_99, %c0_100] : memref<2x32x64xbf16, #tpu.memory_space<vmem>>, vector<1x32x64xbf16>
    %223 = vector.shape_cast %222 : vector<1x32x64xbf16> to vector<32x64xbf16>
    %c1_101 = arith.constant 1 : index
    %c0_102 = arith.constant 0 : index
    %c0_103 = arith.constant 0 : index
    %224 = vector.load %arg12[%c1_101, %c0_102, %c0_103] : memref<2x64x32xbf16, #tpu.memory_space<vmem>>, vector<1x64x32xbf16>
    %225 = vector.shape_cast %224 : vector<1x64x32xbf16> to vector<64x32xbf16>
    %226 = arith.truncf %217 : vector<16x32xf32> to vector<16x32xbf16>
    %cst_104 = arith.constant dense<0.000000e+00> : vector<16x96xf32>
    %227 = tpu.matmul %226, %219, %cst_104 {dimension_numbers = #tpu.dot_dimension_numbers<[1], [0], [0], [1], [0, 0, 1, 1], [], []>} : vector<16x32xbf16>, vector<32x96xbf16>, vector<16x96xf32> -> vector<16x96xf32>
    %c1_105 = arith.constant 1 : index
    %c0_106 = arith.constant 0 : index
    %c0_107 = arith.constant 0 : index
    %228 = vector.load %arg5[%c1_105, %c0_106, %c0_107] : memref<2x1x96xf32, #tpu.memory_space<vmem>>, vector<1x1x96xf32>
    %229 = vector.shape_cast %228 : vector<1x1x96xf32> to vector<1x96xf32>
    %230 = vector.broadcast %229 : vector<1x96xf32> to vector<16x96xf32>
    %231 = arith.addf %227, %230 : vector<16x96xf32>
    %232 = arith.truncf %231 : vector<16x96xf32> to vector<16x96xbf16>
    %cst_108 = arith.constant 0.000000e+00 : f32
    %233 = vector.broadcast %cst_108 : f32 to vector<8x32xf32>
    %234 = vector.extract_strided_slice %232 {offsets = [0, 0], sizes = [8, 16], strides = [1, 1]} : vector<16x96xbf16> to vector<8x16xbf16>
    %235 = vector.extract_strided_slice %232 {offsets = [0, 32], sizes = [8, 16], strides = [1, 1]} : vector<16x96xbf16> to vector<8x16xbf16>
    %236 = vector.extract_strided_slice %232 {offsets = [0, 64], sizes = [8, 16], strides = [1, 1]} : vector<16x96xbf16> to vector<8x16xbf16>
    %cst_109 = arith.constant dense<0.000000e+00> : vector<8x8xf32>
    %237 = tpu.matmul %234, %235, %cst_109 {dimension_numbers = #tpu.dot_dimension_numbers<[1], [1], [0], [0], [0, 0, 1, 0], [], []>} : vector<8x16xbf16>, vector<8x16xbf16>, vector<8x8xf32> -> vector<8x8xf32>
    %238 = arith.addf %237, %27 : vector<8x8xf32>
    %cst_110 = arith.constant dense<0xFF800000> : vector<8xf32>
    %239 = vector.multi_reduction <maximumf>, %238, %cst_110 [1] : vector<8x8xf32> to vector<8xf32>
    %240 = vector.shape_cast %239 : vector<8xf32> to vector<8x1xf32>
    %241 = vector.broadcast %240 : vector<8x1xf32> to vector<8x8xf32>
    %242 = arith.subf %238, %241 : vector<8x8xf32>
    %243 = math.exp %242 : vector<8x8xf32>
    %cst_111 = arith.constant dense<0.000000e+00> : vector<8xf32>
    %244 = vector.multi_reduction <add>, %243, %cst_111 [1] : vector<8x8xf32> to vector<8xf32>
    %245 = vector.shape_cast %244 : vector<8xf32> to vector<8x1xf32>
    %246 = tpu.reciprocal %245 {approx = true} : vector<8x1xf32> -> vector<8x1xf32>
    %247 = vector.broadcast %246 : vector<8x1xf32> to vector<8x8xf32>
    %248 = arith.mulf %243, %247 : vector<8x8xf32>
    %249 = arith.truncf %248 : vector<8x8xf32> to vector<8x8xbf16>
    %cst_112 = arith.constant dense<0.000000e+00> : vector<8x16xf32>
    %250 = tpu.matmul %249, %236, %cst_112 {dimension_numbers = #tpu.dot_dimension_numbers<[1], [0], [0], [1], [0, 0, 1, 1], [], []>} : vector<8x8xbf16>, vector<8x16xbf16>, vector<8x16xf32> -> vector<8x16xf32>
    %251 = arith.truncf %250 : vector<8x16xf32> to vector<8x16xbf16>
    %252 = vector.extract_strided_slice %221 {offsets = [0, 0], sizes = [16, 32], strides = [1, 1]} : vector<32x32xbf16> to vector<16x32xbf16>
    %cst_113 = arith.constant dense<0.000000e+00> : vector<8x32xf32>
    %253 = tpu.matmul %251, %252, %cst_113 {dimension_numbers = #tpu.dot_dimension_numbers<[1], [0], [0], [1], [0, 0, 1, 1], [], []>} : vector<8x16xbf16>, vector<16x32xbf16>, vector<8x32xf32> -> vector<8x32xf32>
    %254 = arith.addf %233, %253 : vector<8x32xf32>
    %255 = vector.extract_strided_slice %232 {offsets = [0, 16], sizes = [8, 16], strides = [1, 1]} : vector<16x96xbf16> to vector<8x16xbf16>
    %256 = vector.extract_strided_slice %232 {offsets = [0, 48], sizes = [8, 16], strides = [1, 1]} : vector<16x96xbf16> to vector<8x16xbf16>
    %257 = vector.extract_strided_slice %232 {offsets = [0, 80], sizes = [8, 16], strides = [1, 1]} : vector<16x96xbf16> to vector<8x16xbf16>
    %cst_114 = arith.constant dense<0.000000e+00> : vector<8x8xf32>
    %258 = tpu.matmul %255, %256, %cst_114 {dimension_numbers = #tpu.dot_dimension_numbers<[1], [1], [0], [0], [0, 0, 1, 0], [], []>} : vector<8x16xbf16>, vector<8x16xbf16>, vector<8x8xf32> -> vector<8x8xf32>
    %259 = arith.addf %258, %27 : vector<8x8xf32>
    %cst_115 = arith.constant dense<0xFF800000> : vector<8xf32>
    %260 = vector.multi_reduction <maximumf>, %259, %cst_115 [1] : vector<8x8xf32> to vector<8xf32>
    %261 = vector.shape_cast %260 : vector<8xf32> to vector<8x1xf32>
    %262 = vector.broadcast %261 : vector<8x1xf32> to vector<8x8xf32>
    %263 = arith.subf %259, %262 : vector<8x8xf32>
    %264 = math.exp %263 : vector<8x8xf32>
    %cst_116 = arith.constant dense<0.000000e+00> : vector<8xf32>
    %265 = vector.multi_reduction <add>, %264, %cst_116 [1] : vector<8x8xf32> to vector<8xf32>
    %266 = vector.shape_cast %265 : vector<8xf32> to vector<8x1xf32>
    %267 = tpu.reciprocal %266 {approx = true} : vector<8x1xf32> -> vector<8x1xf32>
    %268 = vector.broadcast %267 : vector<8x1xf32> to vector<8x8xf32>
    %269 = arith.mulf %264, %268 : vector<8x8xf32>
    %270 = arith.truncf %269 : vector<8x8xf32> to vector<8x8xbf16>
    %cst_117 = arith.constant dense<0.000000e+00> : vector<8x16xf32>
    %271 = tpu.matmul %270, %257, %cst_117 {dimension_numbers = #tpu.dot_dimension_numbers<[1], [0], [0], [1], [0, 0, 1, 1], [], []>} : vector<8x8xbf16>, vector<8x16xbf16>, vector<8x16xf32> -> vector<8x16xf32>
    %272 = arith.truncf %271 : vector<8x16xf32> to vector<8x16xbf16>
    %273 = vector.extract_strided_slice %221 {offsets = [16, 0], sizes = [16, 32], strides = [1, 1]} : vector<32x32xbf16> to vector<16x32xbf16>
    %cst_118 = arith.constant dense<0.000000e+00> : vector<8x32xf32>
    %274 = tpu.matmul %272, %273, %cst_118 {dimension_numbers = #tpu.dot_dimension_numbers<[1], [0], [0], [1], [0, 0, 1, 1], [], []>} : vector<8x16xbf16>, vector<16x32xbf16>, vector<8x32xf32> -> vector<8x32xf32>
    %275 = arith.addf %254, %274 : vector<8x32xf32>
    %c0_119 = arith.constant 0 : index
    %c0_120 = arith.constant 0 : index
    %276 = vector.load %arg19[%c0_119, %c0_120] : memref<16x32xf32, #tpu.memory_space<vmem>>, vector<8x32xf32>
    tpu.vector_store %arg19[%c0_119, %c0_120], %275 {strides = array<i32>} : memref<16x32xf32, #tpu.memory_space<vmem>>, vector<8x32xf32>,
    %cst_121 = arith.constant 0.000000e+00 : f32
    %277 = vector.broadcast %cst_121 : f32 to vector<8x32xf32>
    %278 = vector.extract_strided_slice %232 {offsets = [8, 0], sizes = [8, 16], strides = [1, 1]} : vector<16x96xbf16> to vector<8x16xbf16>
    %279 = vector.extract_strided_slice %232 {offsets = [8, 32], sizes = [8, 16], strides = [1, 1]} : vector<16x96xbf16> to vector<8x16xbf16>
    %280 = vector.extract_strided_slice %232 {offsets = [8, 64], sizes = [8, 16], strides = [1, 1]} : vector<16x96xbf16> to vector<8x16xbf16>
    %cst_122 = arith.constant dense<0.000000e+00> : vector<8x8xf32>
    %281 = tpu.matmul %278, %279, %cst_122 {dimension_numbers = #tpu.dot_dimension_numbers<[1], [1], [0], [0], [0, 0, 1, 0], [], []>} : vector<8x16xbf16>, vector<8x16xbf16>, vector<8x8xf32> -> vector<8x8xf32>
    %282 = arith.addf %281, %30 : vector<8x8xf32>
    %cst_123 = arith.constant dense<0xFF800000> : vector<8xf32>
    %283 = vector.multi_reduction <maximumf>, %282, %cst_123 [1] : vector<8x8xf32> to vector<8xf32>
    %284 = vector.shape_cast %283 : vector<8xf32> to vector<8x1xf32>
    %285 = vector.broadcast %284 : vector<8x1xf32> to vector<8x8xf32>
    %286 = arith.subf %282, %285 : vector<8x8xf32>
    %287 = math.exp %286 : vector<8x8xf32>
    %cst_124 = arith.constant dense<0.000000e+00> : vector<8xf32>
    %288 = vector.multi_reduction <add>, %287, %cst_124 [1] : vector<8x8xf32> to vector<8xf32>
    %289 = vector.shape_cast %288 : vector<8xf32> to vector<8x1xf32>
    %290 = tpu.reciprocal %289 {approx = true} : vector<8x1xf32> -> vector<8x1xf32>
    %291 = vector.broadcast %290 : vector<8x1xf32> to vector<8x8xf32>
    %292 = arith.mulf %287, %291 : vector<8x8xf32>
    %293 = arith.truncf %292 : vector<8x8xf32> to vector<8x8xbf16>
    %cst_125 = arith.constant dense<0.000000e+00> : vector<8x16xf32>
    %294 = tpu.matmul %293, %280, %cst_125 {dimension_numbers = #tpu.dot_dimension_numbers<[1], [0], [0], [1], [0, 0, 1, 1], [], []>} : vector<8x8xbf16>, vector<8x16xbf16>, vector<8x16xf32> -> vector<8x16xf32>
    %295 = arith.truncf %294 : vector<8x16xf32> to vector<8x16xbf16>
    %296 = vector.extract_strided_slice %221 {offsets = [0, 0], sizes = [16, 32], strides = [1, 1]} : vector<32x32xbf16> to vector<16x32xbf16>
    %cst_126 = arith.constant dense<0.000000e+00> : vector<8x32xf32>
    %297 = tpu.matmul %295, %296, %cst_126 {dimension_numbers = #tpu.dot_dimension_numbers<[1], [0], [0], [1], [0, 0, 1, 1], [], []>} : vector<8x16xbf16>, vector<16x32xbf16>, vector<8x32xf32> -> vector<8x32xf32>
    %298 = arith.addf %277, %297 : vector<8x32xf32>
    %299 = vector.extract_strided_slice %232 {offsets = [8, 16], sizes = [8, 16], strides = [1, 1]} : vector<16x96xbf16> to vector<8x16xbf16>
    %300 = vector.extract_strided_slice %232 {offsets = [8, 48], sizes = [8, 16], strides = [1, 1]} : vector<16x96xbf16> to vector<8x16xbf16>
    %301 = vector.extract_strided_slice %232 {offsets = [8, 80], sizes = [8, 16], strides = [1, 1]} : vector<16x96xbf16> to vector<8x16xbf16>
    %cst_127 = arith.constant dense<0.000000e+00> : vector<8x8xf32>
    %302 = tpu.matmul %299, %300, %cst_127 {dimension_numbers = #tpu.dot_dimension_numbers<[1], [1], [0], [0], [0, 0, 1, 0], [], []>} : vector<8x16xbf16>, vector<8x16xbf16>, vector<8x8xf32> -> vector<8x8xf32>
    %303 = arith.addf %302, %30 : vector<8x8xf32>
    %cst_128 = arith.constant dense<0xFF800000> : vector<8xf32>
    %304 = vector.multi_reduction <maximumf>, %303, %cst_128 [1] : vector<8x8xf32> to vector<8xf32>
    %305 = vector.shape_cast %304 : vector<8xf32> to vector<8x1xf32>
    %306 = vector.broadcast %305 : vector<8x1xf32> to vector<8x8xf32>
    %307 = arith.subf %303, %306 : vector<8x8xf32>
    %308 = math.exp %307 : vector<8x8xf32>
    %cst_129 = arith.constant dense<0.000000e+00> : vector<8xf32>
    %309 = vector.multi_reduction <add>, %308, %cst_129 [1] : vector<8x8xf32> to vector<8xf32>
    %310 = vector.shape_cast %309 : vector<8xf32> to vector<8x1xf32>
    %311 = tpu.reciprocal %310 {approx = true} : vector<8x1xf32> -> vector<8x1xf32>
    %312 = vector.broadcast %311 : vector<8x1xf32> to vector<8x8xf32>
    %313 = arith.mulf %308, %312 : vector<8x8xf32>
    %314 = arith.truncf %313 : vector<8x8xf32> to vector<8x8xbf16>
    %cst_130 = arith.constant dense<0.000000e+00> : vector<8x16xf32>
    %315 = tpu.matmul %314, %301, %cst_130 {dimension_numbers = #tpu.dot_dimension_numbers<[1], [0], [0], [1], [0, 0, 1, 1], [], []>} : vector<8x8xbf16>, vector<8x16xbf16>, vector<8x16xf32> -> vector<8x16xf32>
    %316 = arith.truncf %315 : vector<8x16xf32> to vector<8x16xbf16>
    %317 = vector.extract_strided_slice %221 {offsets = [16, 0], sizes = [16, 32], strides = [1, 1]} : vector<32x32xbf16> to vector<16x32xbf16>
    %cst_131 = arith.constant dense<0.000000e+00> : vector<8x32xf32>
    %318 = tpu.matmul %316, %317, %cst_131 {dimension_numbers = #tpu.dot_dimension_numbers<[1], [0], [0], [1], [0, 0, 1, 1], [], []>} : vector<8x16xbf16>, vector<16x32xbf16>, vector<8x32xf32> -> vector<8x32xf32>
    %319 = arith.addf %298, %318 : vector<8x32xf32>
    %c8_132 = arith.constant 8 : index
    %c0_133 = arith.constant 0 : index
    %320 = vector.load %arg19[%c8_132, %c0_133] : memref<16x32xf32, #tpu.memory_space<vmem>>, vector<8x32xf32>
    tpu.vector_store %arg19[%c8_132, %c0_133], %319 {strides = array<i32>} : memref<16x32xf32, #tpu.memory_space<vmem>>, vector<8x32xf32>,
    %c0_134 = arith.constant 0 : index
    %c0_135 = arith.constant 0 : index
    %321 = vector.load %arg19[%c0_134, %c0_135] : memref<16x32xf32, #tpu.memory_space<vmem>>, vector<16x32xf32>
    %c1_136 = arith.constant 1 : index
    %c0_137 = arith.constant 0 : index
    %c0_138 = arith.constant 0 : index
    %322 = vector.load %arg7[%c1_136, %c0_137, %c0_138] : memref<2x1x32xf32, #tpu.memory_space<vmem>>, vector<1x1x32xf32>
    %323 = vector.shape_cast %322 : vector<1x1x32xf32> to vector<1x32xf32>
    %324 = vector.broadcast %323 : vector<1x32xf32> to vector<16x32xf32>
    %325 = arith.addf %321, %324 : vector<16x32xf32>
    %326 = arith.addf %325, %217 : vector<16x32xf32>
    %c1_139 = arith.constant 1 : index
    %c0_140 = arith.constant 0 : index
    %c0_141 = arith.constant 0 : index
    %327 = vector.load %arg8[%c1_139, %c0_140, %c0_141] : memref<2x1x32xf32, #tpu.memory_space<vmem>>, vector<1x1x32xf32>
    %328 = vector.shape_cast %327 : vector<1x1x32xf32> to vector<1x32xf32>
    %c1_142 = arith.constant 1 : index
    %c0_143 = arith.constant 0 : index
    %c0_144 = arith.constant 0 : index
    %329 = vector.load %arg9[%c1_142, %c0_143, %c0_144] : memref<2x1x32xf32, #tpu.memory_space<vmem>>, vector<1x1x32xf32>
    %330 = vector.shape_cast %329 : vector<1x1x32xf32> to vector<1x32xf32>
    %cst_145 = arith.constant dense<0.000000e+00> : vector<16xf32>
    %331 = vector.multi_reduction <add>, %326, %cst_145 [1] : vector<16x32xf32> to vector<16xf32>
    %332 = vector.shape_cast %331 : vector<16xf32> to vector<16x1xf32>
    %cst_146 = arith.constant 3.200000e+01 : f32
    %333 = vector.broadcast %cst_146 : f32 to vector<16x1xf32>
    %334 = arith.divf %332, %333 : vector<16x1xf32>
    %335 = vector.broadcast %334 : vector<16x1xf32> to vector<16x32xf32>
    %336 = arith.subf %326, %335 : vector<16x32xf32>
    %337 = arith.mulf %336, %336 : vector<16x32xf32>
    %cst_147 = arith.constant dense<0.000000e+00> : vector<16xf32>
    %338 = vector.multi_reduction <add>, %337, %cst_147 [1] : vector<16x32xf32> to vector<16xf32>
    %339 = vector.shape_cast %338 : vector<16xf32> to vector<16x1xf32>
    %cst_148 = arith.constant 3.200000e+01 : f32
    %340 = vector.broadcast %cst_148 : f32 to vector<16x1xf32>
    %341 = arith.divf %339, %340 : vector<16x1xf32>
    %342 = vector.broadcast %334 : vector<16x1xf32> to vector<16x32xf32>
    %343 = arith.subf %326, %342 : vector<16x32xf32>
    %cst_149 = arith.constant 9.99999974E-6 : f32
    %344 = vector.broadcast %cst_149 : f32 to vector<16x1xf32>
    %345 = arith.addf %341, %344 : vector<16x1xf32>
    %346 = math.rsqrt %345 : vector<16x1xf32>
    %347 = vector.broadcast %346 : vector<16x1xf32> to vector<16x32xf32>
    %348 = arith.mulf %343, %347 : vector<16x32xf32>
    %349 = vector.broadcast %328 : vector<1x32xf32> to vector<16x32xf32>
    %350 = arith.mulf %348, %349 : vector<16x32xf32>
    %351 = vector.broadcast %330 : vector<1x32xf32> to vector<16x32xf32>
    %352 = arith.addf %350, %351 : vector<16x32xf32>
    %353 = arith.truncf %352 : vector<16x32xf32> to vector<16x32xbf16>
    %cst_150 = arith.constant dense<0.000000e+00> : vector<16x64xf32>
    %354 = tpu.matmul %353, %223, %cst_150 {dimension_numbers = #tpu.dot_dimension_numbers<[1], [0], [0], [1], [0, 0, 1, 1], [], []>} : vector<16x32xbf16>, vector<32x64xbf16>, vector<16x64xf32> -> vector<16x64xf32>
    %c1_151 = arith.constant 1 : index
    %c0_152 = arith.constant 0 : index
    %c0_153 = arith.constant 0 : index
    %355 = vector.load %arg11[%c1_151, %c0_152, %c0_153] : memref<2x1x64xf32, #tpu.memory_space<vmem>>, vector<1x1x64xf32>
    %356 = vector.shape_cast %355 : vector<1x1x64xf32> to vector<1x64xf32>
    %357 = vector.broadcast %356 : vector<1x64xf32> to vector<16x64xf32>
    %358 = arith.addf %354, %357 : vector<16x64xf32>
    %cst_154 = arith.constant 5.000000e-01 : f32
    %359 = vector.broadcast %cst_154 : f32 to vector<16x64xf32>
    %360 = arith.mulf %359, %358 : vector<16x64xf32>
    %cst_155 = arith.constant 4.471500e-02 : f32
    %361 = vector.broadcast %cst_155 : f32 to vector<16x64xf32>
    %362 = arith.mulf %361, %358 : vector<16x64xf32>
    %363 = arith.mulf %362, %358 : vector<16x64xf32>
    %364 = arith.mulf %363, %358 : vector<16x64xf32>
    %365 = arith.addf %358, %364 : vector<16x64xf32>
    %cst_156 = arith.constant 0.797884583 : f32
    %366 = vector.broadcast %cst_156 : f32 to vector<16x64xf32>
    %367 = arith.mulf %366, %365 : vector<16x64xf32>
    %368 = math.tanh %367 : vector<16x64xf32>
    %cst_157 = arith.constant 1.000000e+00 : f32
    %369 = vector.broadcast %cst_157 : f32 to vector<16x64xf32>
    %370 = arith.addf %369, %368 : vector<16x64xf32>
    %371 = arith.mulf %360, %370 : vector<16x64xf32>
    %372 = arith.truncf %371 : vector<16x64xf32> to vector<16x64xbf16>
    %cst_158 = arith.constant dense<0.000000e+00> : vector<16x32xf32>
    %373 = tpu.matmul %372, %225, %cst_158 {dimension_numbers = #tpu.dot_dimension_numbers<[1], [0], [0], [1], [0, 0, 1, 1], [], []>} : vector<16x64xbf16>, vector<64x32xbf16>, vector<16x32xf32> -> vector<16x32xf32>
    %c1_159 = arith.constant 1 : index
    %c0_160 = arith.constant 0 : index
    %c0_161 = arith.constant 0 : index
    %374 = vector.load %arg13[%c1_159, %c0_160, %c0_161] : memref<2x1x32xf32, #tpu.memory_space<vmem>>, vector<1x1x32xf32>
    %375 = vector.shape_cast %374 : vector<1x1x32xf32> to vector<1x32xf32>
    %376 = vector.broadcast %375 : vector<1x32xf32> to vector<16x32xf32>
    %377 = arith.addf %373, %376 : vector<16x32xf32>
    %378 = arith.addf %377, %352 : vector<16x32xf32>
    %c1_162 = arith.constant 1 : index
    %c0_163 = arith.constant 0 : index
    %c0_164 = arith.constant 0 : index
    %379 = vector.load %arg14[%c1_162, %c0_163, %c0_164] : memref<2x1x32xf32, #tpu.memory_space<vmem>>, vector<1x1x32xf32>
    %380 = vector.shape_cast %379 : vector<1x1x32xf32> to vector<1x32xf32>
    %c1_165 = arith.constant 1 : index
    %c0_166 = arith.constant 0 : index
    %c0_167 = arith.constant 0 : index
    %381 = vector.load %arg15[%c1_165, %c0_166, %c0_167] : memref<2x1x32xf32, #tpu.memory_space<vmem>>, vector<1x1x32xf32>
    %382 = vector.shape_cast %381 : vector<1x1x32xf32> to vector<1x32xf32>
    %cst_168 = arith.constant dense<0.000000e+00> : vector<16xf32>
    %383 = vector.multi_reduction <add>, %378, %cst_168 [1] : vector<16x32xf32> to vector<16xf32>
    %384 = vector.shape_cast %383 : vector<16xf32> to vector<16x1xf32>
    %cst_169 = arith.constant 3.200000e+01 : f32
    %385 = vector.broadcast %cst_169 : f32 to vector<16x1xf32>
    %386 = arith.divf %384, %385 : vector<16x1xf32>
    %387 = vector.broadcast %386 : vector<16x1xf32> to vector<16x32xf32>
    %388 = arith.subf %378, %387 : vector<16x32xf32>
    %389 = arith.mulf %388, %388 : vector<16x32xf32>
    %cst_170 = arith.constant dense<0.000000e+00> : vector<16xf32>
    %390 = vector.multi_reduction <add>, %389, %cst_170 [1] : vector<16x32xf32> to vector<16xf32>
    %391 = vector.shape_cast %390 : vector<16xf32> to vector<16x1xf32>
    %cst_171 = arith.constant 3.200000e+01 : f32
    %392 = vector.broadcast %cst_171 : f32 to vector<16x1xf32>
    %393 = arith.divf %391, %392 : vector<16x1xf32>
    %394 = vector.broadcast %386 : vector<16x1xf32> to vector<16x32xf32>
    %395 = arith.subf %378, %394 : vector<16x32xf32>
    %cst_172 = arith.constant 9.99999974E-6 : f32
    %396 = vector.broadcast %cst_172 : f32 to vector<16x1xf32>
    %397 = arith.addf %393, %396 : vector<16x1xf32>
    %398 = math.rsqrt %397 : vector<16x1xf32>
    %399 = vector.broadcast %398 : vector<16x1xf32> to vector<16x32xf32>
    %400 = arith.mulf %395, %399 : vector<16x32xf32>
    %401 = vector.broadcast %380 : vector<1x32xf32> to vector<16x32xf32>
    %402 = arith.mulf %400, %401 : vector<16x32xf32>
    %403 = vector.broadcast %382 : vector<1x32xf32> to vector<16x32xf32>
    %404 = arith.addf %402, %403 : vector<16x32xf32>
    %c0_173 = arith.constant 0 : index
    %c0_174 = arith.constant 0 : index
    %405 = vector.load %arg16[%c0_173, %c0_174] : memref<32x2xf32, #tpu.memory_space<vmem>>, vector<32x2xf32>
    %cst_175 = arith.constant dense<0.000000e+00> : vector<16x2xf32>
    %406 = tpu.matmul %404, %405, %cst_175 {dimension_numbers = #tpu.dot_dimension_numbers<[1], [0], [0], [1], [0, 0, 1, 1], [], []>} : vector<16x32xf32>, vector<32x2xf32>, vector<16x2xf32> -> vector<16x2xf32>
    %c0_176 = arith.constant 0 : index
    %c0_177 = arith.constant 0 : index
    %407 = vector.load %arg17[%c0_176, %c0_177] : memref<1x2xf32, #tpu.memory_space<vmem>>, vector<1x2xf32>
    %408 = vector.broadcast %407 : vector<1x2xf32> to vector<16x2xf32>
    %409 = arith.addf %406, %408 : vector<16x2xf32>
    %410 = vector.extract_strided_slice %409 {offsets = [0, 0], sizes = [1, 2], strides = [1, 1]} : vector<16x2xf32> to vector<1x2xf32>
    %c0_178 = arith.constant 0 : index
    %c0_179 = arith.constant 0 : index
    %411 = vector.load %arg18[%c0_178, %c0_179] : memref<2x2xf32, #tpu.memory_space<vmem>>, vector<1x2xf32>
    tpu.vector_store %arg18[%c0_178, %c0_179], %410 {strides = array<i32>} : memref<2x2xf32, #tpu.memory_space<vmem>>, vector<1x2xf32>,
    %412 = vector.extract_strided_slice %409 {offsets = [8, 0], sizes = [1, 2], strides = [1, 1]} : vector<16x2xf32> to vector<1x2xf32>
    %c1_180 = arith.constant 1 : index
    %c0_181 = arith.constant 0 : index
    %413 = vector.load %arg18[%c1_180, %c0_181] : memref<2x2xf32, #tpu.memory_space<vmem>>, vector<1x2xf32>
    tpu.vector_store %arg18[%c1_180, %c0_181], %412 {strides = array<i32>} : memref<2x2xf32, #tpu.memory_space<vmem>>, vector<1x2xf32>,
    return
  }
}

</mosaic_0001>

<llo_original>
// kernel: sarcasm_classifier_forward.1
$region0: #{sarcasm_classifier_forward.1}
  #allocation0 [shape = 'u32[]', space=smem, size = 0x4, offset = 0x4, fixed_abs, tag = 'smem constant byte address 0x4 - core index']
  #allocation1 [shape = 'u32[72,128]{1,0:T(1,128)}', space=vmem, size = 0x9000, scoped, tag = 'internal scratch']
  #allocation2 [shape = 'f32[16,32]{1,0:T(8,128)}', space=vmem, size = 0x2000, scoped, tag = 'scratch operand']
  %s0 = inlined_call_operand.vmem [shape: f32[16,32], index: 0, kind: input, shape index: {}]
  %s1 = inlined_call_operand.vmem [shape: f32[2,8], index: 1, kind: input, shape index: {}]
  %s2 = inlined_call_operand.vmem [shape: f32[1,32], index: 2, kind: input, shape index: {}]
  %s3 = inlined_call_operand.vmem [shape: f32[1,32], index: 3, kind: input, shape index: {}]
  %s4 = inlined_call_operand.vmem [shape: bf16[2,32,96], index: 4, kind: input, shape index: {}]
  %s5 = inlined_call_operand.vmem [shape: f32[2,1,96], index: 5, kind: input, shape index: {}]
  %s6 = inlined_call_operand.vmem [shape: bf16[2,32,32], index: 6, kind: input, shape index: {}]
  %s7 = inlined_call_operand.vmem [shape: f32[2,1,32], index: 7, kind: input, shape index: {}]
  %s8 = inlined_call_operand.vmem [shape: f32[2,1,32], index: 8, kind: input, shape index: {}]
  %s9 = inlined_call_operand.vmem [shape: f32[2,1,32], index: 9, kind: input, shape index: {}]
  %s10 = inlined_call_operand.vmem [shape: bf16[2,32,64], index: 10, kind: input, shape index: {}]
  %s11 = inlined_call_operand.vmem [shape: f32[2,1,64], index: 11, kind: input, shape index: {}]
  %s12 = inlined_call_operand.vmem [shape: bf16[2,64,32], index: 12, kind: input, shape index: {}]
  %s13 = inlined_call_operand.vmem [shape: f32[2,1,32], index: 13, kind: input, shape index: {}]
  %s14 = inlined_call_operand.vmem [shape: f32[2,1,32], index: 14, kind: input, shape index: {}]
  %s15 = inlined_call_operand.vmem [shape: f32[2,1,32], index: 15, kind: input, shape index: {}]
  %s16 = inlined_call_operand.vmem [shape: f32[32,2], index: 16, kind: input, shape index: {}]
  %s17 = inlined_call_operand.vmem [shape: f32[1,2], index: 17, kind: input, shape index: {}]
  %s18 = inlined_call_operand.hbm [shape: f32[2,2], index: 18, kind: output, shape index: {}]
  %s19 = sld [smem:[#allocation0]]
  $region82: #{sarcasm_classifier_forward.1} parent=0
    _
  %s21 = ssub.s32 1, %s19
  %s22 = scalar_select 0, %s21, %s19
  $region1: #{sarcasm_classifier_forward.1} parent=0
    #allocation3 [shape = 'u8[1024]{0}', space=vmem, size = 0x400, scoped, tag = 'output window, operand 0, single buffered']
    #allocation4 [shape = 's32[1]{0}', space=sflag, size = 0x4, scoped, tag = 'scoped memory for sarcasm_classifier_forward.1']
    %23 = vsyncpa [#allocation4], 0
    // Predicated region
    $region2: #{sarcasm_classifier_forward.1} parent=1 // pred_check
      _
    $region3: #{sarcasm_classifier_forward.1} parent=1 // pred_check_branch
      %25 = sbr.rel (0) target = $region5
    $region4: #{sarcasm_classifier_forward.1} parent=1 // pred_region
      _
    $region5: #{sarcasm_classifier_forward.1} parent=1 // pred_fallthru
      _
    // Predicated region
    $region6: #{sarcasm_classifier_forward.1} parent=1 // pred_check
      _
    $region7: #{sarcasm_classifier_forward.1} parent=1 // pred_check_branch
      %27 = sbr.rel (0) target = $region9
    $region8: #{sarcasm_classifier_forward.1} parent=1 // pred_region
      _
    $region9: #{sarcasm_classifier_forward.1} parent=1 // pred_fallthru
      _
    // Predicated region
    $region10: #{sarcasm_classifier_forward.1} parent=1 // pred_check
      _
    $region11: #{sarcasm_classifier_forward.1} parent=1 // pred_check_branch
      %29 = sbr.rel (0) target = $region13
    $region12: #{sarcasm_classifier_forward.1} parent=1 // pred_region
      _
    $region13: #{sarcasm_classifier_forward.1} parent=1 // pred_fallthru
      _
    // Predicated region
    $region14: #{sarcasm_classifier_forward.1} parent=1 // pred_check
      _
    $region15: #{sarcasm_classifier_forward.1} parent=1 // pred_check_branch
      %31 = sbr.rel (0) target = $region17
    $region16: #{sarcasm_classifier_forward.1} parent=1 // pred_region
      _
    $region17: #{sarcasm_classifier_forward.1} parent=1 // pred_fallthru
      _
    // Predicated region
    $region18: #{sarcasm_classifier_forward.1} parent=1 // pred_check
      _
    $region19: #{sarcasm_classifier_forward.1} parent=1 // pred_check_branch
      %33 = sbr.rel (0) target = $region21
    $region20: #{sarcasm_classifier_forward.1} parent=1 // pred_region
      _
    $region21: #{sarcasm_classifier_forward.1} parent=1 // pred_fallthru
      _
    // Predicated region
    $region22: #{sarcasm_classifier_forward.1} parent=1 // pred_check
      _
    $region23: #{sarcasm_classifier_forward.1} parent=1 // pred_check_branch
      %35 = sbr.rel (0) target = $region25
    $region24: #{sarcasm_classifier_forward.1} parent=1 // pred_region
      _
    $region25: #{sarcasm_classifier_forward.1} parent=1 // pred_fallthru
      _
    // Predicated region
    $region26: #{sarcasm_classifier_forward.1} parent=1 // pred_check
      _
    $region27: #{sarcasm_classifier_forward.1} parent=1 // pred_check_branch
      %37 = sbr.rel (0) target = $region29
    $region28: #{sarcasm_classifier_forward.1} parent=1 // pred_region
      _
    $region29: #{sarcasm_classifier_forward.1} parent=1 // pred_fallthru
      _
    // Predicated region
    $region30: #{sarcasm_classifier_forward.1} parent=1 // pred_check
      _
    $region31: #{sarcasm_classifier_forward.1} parent=1 // pred_check_branch
      %39 = sbr.rel (0) target = $region33
    $region32: #{sarcasm_classifier_forward.1} parent=1 // pred_region
      _
    $region33: #{sarcasm_classifier_forward.1} parent=1 // pred_fallthru
      _
    // Predicated region
    $region34: #{sarcasm_classifier_forward.1} parent=1 // pred_check
      _
    $region35: #{sarcasm_classifier_forward.1} parent=1 // pred_check_branch
      %41 = sbr.rel (0) target = $region37
    $region36: #{sarcasm_classifier_forward.1} parent=1 // pred_region
      _
    $region37: #{sarcasm_classifier_forward.1} parent=1 // pred_fallthru
      _
    // Predicated region
    $region38: #{sarcasm_classifier_forward.1} parent=1 // pred_check
      _
    $region39: #{sarcasm_classifier_forward.1} parent=1 // pred_check_branch
      %43 = sbr.rel (0) target = $region41
    $region40: #{sarcasm_classifier_forward.1} parent=1 // pred_region
      _
    $region41: #{sarcasm_classifier_forward.1} parent=1 // pred_fallthru
      _
    // Predicated region
    $region42: #{sarcasm_classifier_forward.1} parent=1 // pred_check
      _
    $region43: #{sarcasm_classifier_forward.1} parent=1 // pred_check_branch
      %45 = sbr.rel (0) target = $region45
    $region44: #{sarcasm_classifier_forward.1} parent=1 // pred_region
      _
    $region45: #{sarcasm_classifier_forward.1} parent=1 // pred_fallthru
      _
    // Predicated region
    $region46: #{sarcasm_classifier_forward.1} parent=1 // pred_check
      _
    $region47: #{sarcasm_classifier_forward.1} parent=1 // pred_check_branch
      %47 = sbr.rel (0) target = $region49
    $region48: #{sarcasm_classifier_forward.1} parent=1 // pred_region
      _
    $region49: #{sarcasm_classifier_forward.1} parent=1 // pred_fallthru
      _
    // Predicated region
    $region50: #{sarcasm_classifier_forward.1} parent=1 // pred_check
      _
    $region51: #{sarcasm_classifier_forward.1} parent=1 // pred_check_branch
      %49 = sbr.rel (0) target = $region53
    $region52: #{sarcasm_classifier_forward.1} parent=1 // pred_region
      _
    $region53: #{sarcasm_classifier_forward.1} parent=1 // pred_fallthru
      _
    // Predicated region
    $region54: #{sarcasm_classifier_forward.1} parent=1 // pred_check
      _
    $region55: #{sarcasm_classifier_forward.1} parent=1 // pred_check_branch
      %51 = sbr.rel (0) target = $region57
    $region56: #{sarcasm_classifier_forward.1} parent=1 // pred_region
      _
    $region57: #{sarcasm_classifier_forward.1} parent=1 // pred_fallthru
      _
    // Predicated region
    $region58: #{sarcasm_classifier_forward.1} parent=1 // pred_check
      _
    $region59: #{sarcasm_classifier_forward.1} parent=1 // pred_check_branch
      %53 = sbr.rel (0) target = $region61
    $region60: #{sarcasm_classifier_forward.1} parent=1 // pred_region
      _
    $region61: #{sarcasm_classifier_forward.1} parent=1 // pred_fallthru
      _
    // Predicated region
    $region62: #{sarcasm_classifier_forward.1} parent=1 // pred_check
      _
    $region63: #{sarcasm_classifier_forward.1} parent=1 // pred_check_branch
      %55 = sbr.rel (0) target = $region65
    $region64: #{sarcasm_classifier_forward.1} parent=1 // pred_region
      _
    $region65: #{sarcasm_classifier_forward.1} parent=1 // pred_fallthru
      _
    // Predicated region
    $region66: #{sarcasm_classifier_forward.1} parent=1 // pred_check
      _
    $region67: #{sarcasm_classifier_forward.1} parent=1 // pred_check_branch
      %57 = sbr.rel (0) target = $region69
    $region68: #{sarcasm_classifier_forward.1} parent=1 // pred_region
      _
    $region69: #{sarcasm_classifier_forward.1} parent=1 // pred_fallthru
      _
    // Predicated region
    $region70: #{sarcasm_classifier_forward.1} parent=1 // pred_check
      _
    $region71: #{sarcasm_classifier_forward.1} parent=1 // pred_check_branch
      %59 = sbr.rel (0) target = $region73
    $region72: #{sarcasm_classifier_forward.1} parent=1 // pred_region
      _
    $region73: #{sarcasm_classifier_forward.1} parent=1 // pred_fallthru
      _
    %v61 = vld [vmem:[%s0] sm:$0xff]
    %v62 = vld [vmem:[%s0 + $0x8] sm:$0xff]
    %v63 = vld [vmem:[%s2] sm:$0x1]
    %v64 = vld [vmem:[%s3] sm:$0x1]
    %vm65 = vcmask 261120
    %v66 = vsel %vm65, %v61, 0.0
    %67 = vadd.xlane.f32.xlu0 %v66
    %v68 = vpop.xlane.xlu0 %67
    %v69 = vsel %vm65, %v62, 0.0
    %70 = vadd.xlane.f32.xlu0 %v69
    %v71 = vpop.xlane.xlu0 %70
    %v72 = vrcp.pop 32.0
    %v73 = vmul.f32 32.0, %v72
    %v74 = vsub.f32 1.0, %v73
    %v75 = vmul.f32 %v72, %v74
    %v76 = vadd.f32 %v72, %v75
    %vm77 = vweird.f32 %v72
    %v78 = vsel %vm77, %v72, %v76
    %v79 = vmul.f32 %v68, %v78
    %v80 = vmul.f32 %v71, %v78
    %v81 = vsub.f32 %v61, %v79
    %v82 = vsub.f32 %v62, %v80
    %v83 = vmul.f32 %v81, %v81
    %v84 = vmul.f32 %v82, %v82
    %v85 = vsel %vm65, %v83, 0.0
    %86 = vadd.xlane.f32.xlu0 %v85
    %v87 = vpop.xlane.xlu0 %86
    %v88 = vsel %vm65, %v84, 0.0
    %89 = vadd.xlane.f32.xlu0 %v88
    %v90 = vpop.xlane.xlu0 %89
    %v91 = vmul.f32 %v87, %v78
    %v92 = vmul.f32 %v90, %v78
    %v93 = vadd.f32 %v91, 1e-05
    %v94 = vadd.f32 %v92, 1e-05
    %v95 = vrsqrt.pop %v93
    %v96 = vmul.f32 %v95, %v93
    %v97 = vmul.f32 %v96, %v95
    %v98 = vmul.f32 0.5, %v97
    %v99 = vsub.f32 1.5, %v98
    %v100 = vmul.f32 %v95, %v99
    %vm101 = vweird.f32 %v93
    %vm102 = vweird.f32 %v95
    %vm103 = vmor %vm101, %vm102
    %v104 = vsel %vm103, %v95, %v100
    %v105 = vrsqrt.pop %v94
    %v106 = vmul.f32 %v105, %v94
    %v107 = vmul.f32 %v106, %v105
    %v108 = vmul.f32 0.5, %v107
    %v109 = vsub.f32 1.5, %v108
    %v110 = vmul.f32 %v105, %v109
    %vm111 = vweird.f32 %v94
    %vm112 = vweird.f32 %v105
    %vm113 = vmor %vm111, %vm112
    %v114 = vsel %vm113, %v105, %v110
    %v115 = vmul.f32 %v81, %v104
    %v116 = vmul.f32 %v82, %v114
    %v118 = vperm.slane %v63, 0
    %v120 = vmul.f32 %v115, %v118
    %v121 = vmul.f32 %v116, %v118
    %v123 = vperm.slane %v64, 0
    %v125 = vadd.f32 %v120, %v123
    %v126 = vadd.f32 %v121, %v123
    %v127 = vld [vmem:[%s1] sm:$0x1]
    %v128 = vperm.slane %v127, 0
    %v129 = vld [vmem:[%s1 + $0x1] sm:$0x1]
    %v130 = vperm.slane %v129, 0
    %v131 = vld [vmem:[%s4] sm:$0xf]
    %v132 = vld [vmem:[%s4 + $0x4] sm:$0xf]
    %v133 = vld [vmem:[%s4 + $0x8] sm:$0xf]
    %v134 = vld [vmem:[%s4 + $0xc] sm:$0xf]
    %v135 = vld [vmem:[%s6] sm:$0xf]
    %v136 = vld [vmem:[%s6 + $0x4] sm:$0xf]
    %v137 = vld [vmem:[%s6 + $0x8] sm:$0xf]
    %v138 = vld [vmem:[%s6 + $0xc] sm:$0xf]
    %v139 = vld [vmem:[%s10] sm:$0xf]
    %v140 = vld [vmem:[%s10 + $0x4] sm:$0xf]
    %v141 = vld [vmem:[%s10 + $0x8] sm:$0xf]
    %v142 = vld [vmem:[%s10 + $0xc] sm:$0xf]
    %v143 = vld [vmem:[%s12] sm:$0xf]
    %v144 = vld [vmem:[%s12 + $0x4] sm:$0xf]
    %v145 = vld [vmem:[%s12 + $0x8] sm:$0xf]
    %v146 = vld [vmem:[%s12 + $0xc] sm:$0xf]
    %v147 = vld [vmem:[%s12 + $0x10] sm:$0xf]
    %v148 = vld [vmem:[%s12 + $0x14] sm:$0xf]
    %v149 = vld [vmem:[%s12 + $0x18] sm:$0xf]
    %v150 = vld [vmem:[%s12 + $0x1c] sm:$0xf]
    %v151 = vpack.c.bf16 %v126, %v125
    %v152 = vld [vmem:[%s5] sm:$0x1]
    %v154 = vperm.slane %v152, 0
    %v160 = vunpack.c.l.b16 %v131
    %v161 = vunpack.c.l.b16 %v132
    %v162 = vunpack.c.l.b16 %v133
    %v163 = vunpack.c.l.b16 %v134
    %v164 = vpack.c.b16 %v161, %v160
    %v165 = vpack.c.b16 %v163, %v162
    %v169 = vsel %vm65, %v151, 0
    %171 = vmatpush.bf16.msra.mxu0 0
    %172 = vmatpush.bf16.msra.mxu0 0
    %173 = vmatpush.bf16.msra.mxu0 0
    %174 = vmatpush.bf16.msra.mxu0 0
    %175 = vmatpush.bf16.msra.mxu0 0
    %176 = vmatpush.bf16.msra.mxu0 0
    %177 = vmatpush.bf16.msra.mxu0 %v165
    %178 = vmatpush.bf16.msra.mxu0 %v164
    %179 = vmatmul.bf16.gmra.mxu0 %v169
    %v180 = vpop.f32.mrf.mxu0
    %v181 = vadd.f32 %v154, %v180
    %v182 = vpop.f32.mrf.mxu0
    %v183 = vadd.f32 %v154, %v182
    %184 = vdwg.mxu0
    %v185 = vpack.c.bf16 %v181, %v181
    %v186 = vpack.c.bf16 %v183, %v183
    %v188 = vunpack.c.l.b16 %v185
    %v189 = vpack.c.b16 %v188, %v188
    %190 = vrot.lane.b32.xlu0 %v189, 96
    %v191 = vpop.permute.xlu0 %190
    %vm192 = vcmask 130048
    %v194 = vsel %vm192, %v185, 0
    %v197 = vsel %vm192, %v191, 0
    %199 = vmatpush.bf16.xpose.msra.mxu0 0
    %200 = vmatpush.bf16.xpose.msra.mxu0 0
    %201 = vmatpush.bf16.xpose.msra.mxu0 0
    %202 = vmatpush.bf16.xpose.msra.mxu0 0
    %203 = vmatpush.bf16.xpose.msra.mxu0 0
    %204 = vmatpush.bf16.xpose.msra.mxu0 0
    %205 = vmatpush.bf16.xpose.msra.mxu0 0
    %206 = vmatpush.bf16.xpose.msra.mxu0 %v197
    %207 = vmatmul.bf16.gmra.mxu0 %v194
    %v208 = vpop.f32.mrf.mxu0
    %v209 = vadd.f32 %v128, %v208
    %v210 = vpop.f32.mrf.mxu0
    %211 = vdwg.mxu0
    %vm212 = vcmask 64512
    %v213 = vsel %vm212, %v209, -inf
    %214 = vmax.xlane.f32.xlu0 %v213
    %v215 = vpop.xlane.xlu0 %214
    %v216 = vsub.f32 %v209, %v215
    %v217 = vmul.f32 %v216, 1.442695
    %v218 = vpow.pop %v217
    %v219 = vsel %vm212, %v218, 0.0
    %220 = vadd.xlane.f32.xlu0 %v219
    %v221 = vpop.xlane.xlu0 %220
    %v222 = vrcp.pop %v221
    %v223 = vmul.f32 %v218, %v222
    %v224 = vpack.c.bf16 %v223, %v223
    %225 = vrot.lane.b32.xlu0 %v189, 64
    %v226 = vpop.permute.xlu0 %225
    %v228 = vsel %vm212, %v224, 0
    %vm230 = vcmask 1043456
    %v232 = vsel %vm230, %v226, 0
    %234 = vmatpush.bf16.msra.mxu0 0
    %235 = vmatpush.bf16.msra.mxu0 0
    %236 = vmatpush.bf16.msra.mxu0 0
    %237 = vmatpush.bf16.msra.mxu0 0
    %238 = vmatpush.bf16.msra.mxu0 0
    %239 = vmatpush.bf16.msra.mxu0 0
    %240 = vmatpush.bf16.msra.mxu0 0
    %241 = vmatpush.bf16.msra.mxu0 %v232
    %242 = vmatmul.bf16.gmra.mxu0 %v228
    %v243 = vpop.f32.mrf.mxu0
    %v244 = vadd.f32 0.0, %v243
    %v245 = vpop.f32.mrf.mxu0
    %246 = vdwg.mxu0
    %v247 = vpack.c.bf16 %v244, %v244
    %248 = vrot.lane.b32.xlu0 %v189, 112
    %v249 = vpop.permute.xlu0 %248
    %250 = vrot.lane.b32.xlu0 %v189, 80
    %v251 = vpop.permute.xlu0 %250
    %v253 = vsel %vm192, %v249, 0
    %v256 = vsel %vm192, %v251, 0
    %258 = vmatpush.bf16.xpose.msra.mxu0 0
    %259 = vmatpush.bf16.xpose.msra.mxu0 0
    %260 = vmatpush.bf16.xpose.msra.mxu0 0
    %261 = vmatpush.bf16.xpose.msra.mxu0 0
    %262 = vmatpush.bf16.xpose.msra.mxu0 0
    %263 = vmatpush.bf16.xpose.msra.mxu0 0
    %264 = vmatpush.bf16.xpose.msra.mxu0 0
    %265 = vmatpush.bf16.xpose.msra.mxu0 %v256
    %266 = vmatmul.bf16.gmra.mxu0 %v253
    %v267 = vpop.f32.mrf.mxu0
    %v268 = vadd.f32 %v128, %v267
    %v269 = vpop.f32.mrf.mxu0
    %270 = vdwg.mxu0
    %v271 = vsel %vm212, %v268, -inf
    %272 = vmax.xlane.f32.xlu0 %v271
    %v273 = vpop.xlane.xlu0 %272
    %v274 = vsub.f32 %v268, %v273
    %v275 = vmul.f32 %v274, 1.442695
    %v276 = vpow.pop %v275
    %v277 = vsel %vm212, %v276, 0.0
    %278 = vadd.xlane.f32.xlu0 %v277
    %v279 = vpop.xlane.xlu0 %278
    %v280 = vrcp.pop %v279
    %v281 = vmul.f32 %v276, %v280
    %v282 = vpack.c.bf16 %v281, %v281
    %283 = vrot.lane.b32.xlu0 %v189, 48
    %v284 = vpop.permute.xlu0 %283
    %v286 = vsel %vm212, %v282, 0
    %v289 = vsel %vm230, %v284, 0
    %291 = vmatpush.bf16.msra.mxu0 0
    %292 = vmatpush.bf16.msra.mxu0 0
    %293 = vmatpush.bf16.msra.mxu0 0
    %294 = vmatpush.bf16.msra.mxu0 0
    %295 = vmatpush.bf16.msra.mxu0 0
    %296 = vmatpush.bf16.msra.mxu0 0
    %297 = vmatpush.bf16.msra.mxu0 0
    %298 = vmatpush.bf16.msra.mxu0 %v289
    %299 = vmatmul.bf16.gmra.mxu0 %v286
    %v300 = vpop.f32.mrf.mxu0
    %v301 = vadd.f32 0.0, %v300
    %v302 = vpop.f32.mrf.mxu0
    %303 = vdwg.mxu0
    %v304 = vpack.c.bf16 %v301, %v301
    %v307 = vunpack.c.l.b16 %v137
    %v308 = vunpack.c.l.b16 %v138
    %v309 = vpack.c.b16 %v308, %v307
    %v312 = vsel %vm192, %v304, 0
    %314 = vmatpush.bf16.msra.mxu0 0
    %315 = vmatpush.bf16.msra.mxu0 0
    %316 = vmatpush.bf16.msra.mxu0 0
    %317 = vmatpush.bf16.msra.mxu0 0
    %318 = vmatpush.bf16.msra.mxu0 0
    %319 = vmatpush.bf16.msra.mxu0 0
    %320 = vmatpush.bf16.msra.mxu0 0
    %321 = vmatpush.bf16.msra.mxu0 %v309
    %322 = vmatmul.bf16.gmra.mxu0 %v312
    %v323 = vpop.f32.mrf.mxu0
    %v324 = vadd.f32 0.0, %v323
    %v325 = vpop.f32.mrf.mxu0
    %326 = vdwg.mxu0
    %v329 = vunpack.c.l.b16 %v135
    %v330 = vunpack.c.l.b16 %v136
    %v331 = vpack.c.b16 %v330, %v329
    %v334 = vsel %vm192, %v247, 0
    %336 = vmatpush.bf16.msra.mxu0 0
    %337 = vmatpush.bf16.msra.mxu0 0
    %338 = vmatpush.bf16.msra.mxu0 0
    %339 = vmatpush.bf16.msra.mxu0 0
    %340 = vmatpush.bf16.msra.mxu0 0
    %341 = vmatpush.bf16.msra.mxu0 0
    %342 = vmatpush.bf16.msra.mxu0 0
    %343 = vmatpush.bf16.msra.mxu0 %v331
    %344 = vmatmul.bf16.gmra.mxu0 %v334
    %v345 = vpop.f32.mrf.mxu0
    %v346 = vadd.f32 %v324, %v345
    %v347 = vpop.f32.mrf.mxu0
    %348 = vdwg.mxu0
    %349 = vst.msk [vmem:[#allocation2] sm:$0xff] %vm65, %v346
    %v351 = vunpack.c.l.b16 %v186
    %v352 = vpack.c.b16 %v351, %v351
    %353 = vrot.lane.b32.xlu0 %v352, 96
    %v354 = vpop.permute.xlu0 %353
    %v356 = vsel %vm192, %v186, 0
    %v359 = vsel %vm192, %v354, 0
    %361 = vmatpush.bf16.xpose.msra.mxu0 0
    %362 = vmatpush.bf16.xpose.msra.mxu0 0
    %363 = vmatpush.bf16.xpose.msra.mxu0 0
    %364 = vmatpush.bf16.xpose.msra.mxu0 0
    %365 = vmatpush.bf16.xpose.msra.mxu0 0
    %366 = vmatpush.bf16.xpose.msra.mxu0 0
    %367 = vmatpush.bf16.xpose.msra.mxu0 0
    %368 = vmatpush.bf16.xpose.msra.mxu0 %v359
    %369 = vmatmul.bf16.gmra.mxu0 %v356
    %v370 = vpop.f32.mrf.mxu0
    %v371 = vadd.f32 %v130, %v370
    %v372 = vpop.f32.mrf.mxu0
    %373 = vdwg.mxu0
    %v374 = vsel %vm212, %v371, -inf
    %375 = vmax.xlane.f32.xlu0 %v374
    %v376 = vpop.xlane.xlu0 %375
    %v377 = vsub.f32 %v371, %v376
    %v378 = vmul.f32 %v377, 1.442695
    %v379 = vpow.pop %v378
    %v380 = vsel %vm212, %v379, 0.0
    %381 = vadd.xlane.f32.xlu0 %v380
    %v382 = vpop.xlane.xlu0 %381
    %v383 = vrcp.pop %v382
    %v384 = vmul.f32 %v379, %v383
    %v385 = vpack.c.bf16 %v384, %v384
    %386 = vrot.lane.b32.xlu0 %v352, 64
    %v387 = vpop.permute.xlu0 %386
    %v389 = vsel %vm212, %v385, 0
    %v392 = vsel %vm230, %v387, 0
    %394 = vmatpush.bf16.msra.mxu0 0
    %395 = vmatpush.bf16.msra.mxu0 0
    %396 = vmatpush.bf16.msra.mxu0 0
    %397 = vmatpush.bf16.msra.mxu0 0
    %398 = vmatpush.bf16.msra.mxu0 0
    %399 = vmatpush.bf16.msra.mxu0 0
    %400 = vmatpush.bf16.msra.mxu0 0
    %401 = vmatpush.bf16.msra.mxu0 %v392
    %402 = vmatmul.bf16.gmra.mxu0 %v389
    %v403 = vpop.f32.mrf.mxu0
    %v404 = vadd.f32 0.0, %v403
    %v405 = vpop.f32.mrf.mxu0
    %406 = vdwg.mxu0
    %v407 = vpack.c.bf16 %v404, %v404
    %408 = vrot.lane.b32.xlu0 %v352, 112
    %v409 = vpop.permute.xlu0 %408
    %410 = vrot.lane.b32.xlu0 %v352, 80
    %v411 = vpop.permute.xlu0 %410
    %v413 = vsel %vm192, %v409, 0
    %v416 = vsel %vm192, %v411, 0
    %418 = vmatpush.bf16.xpose.msra.mxu0 0
    %419 = vmatpush.bf16.xpose.msra.mxu0 0
    %420 = vmatpush.bf16.xpose.msra.mxu0 0
    %421 = vmatpush.bf16.xpose.msra.mxu0 0
    %422 = vmatpush.bf16.xpose.msra.mxu0 0
    %423 = vmatpush.bf16.xpose.msra.mxu0 0
    %424 = vmatpush.bf16.xpose.msra.mxu0 0
    %425 = vmatpush.bf16.xpose.msra.mxu0 %v416
    %426 = vmatmul.bf16.gmra.mxu0 %v413
    %v427 = vpop.f32.mrf.mxu0
    %v428 = vadd.f32 %v130, %v427
    %v429 = vpop.f32.mrf.mxu0
    %430 = vdwg.mxu0
    %v431 = vsel %vm212, %v428, -inf
    %432 = vmax.xlane.f32.xlu0 %v431
    %v433 = vpop.xlane.xlu0 %432
    %v434 = vsub.f32 %v428, %v433
    %v435 = vmul.f32 %v434, 1.442695
    %v436 = vpow.pop %v435
    %v437 = vsel %vm212, %v436, 0.0
    %438 = vadd.xlane.f32.xlu0 %v437
    %v439 = vpop.xlane.xlu0 %438
    %v440 = vrcp.pop %v439
    %v441 = vmul.f32 %v436, %v440
    %v442 = vpack.c.bf16 %v441, %v441
    %443 = vrot.lane.b32.xlu0 %v352, 48
    %v444 = vpop.permute.xlu0 %443
    %v446 = vsel %vm212, %v442, 0
    %v449 = vsel %vm230, %v444, 0
    %451 = vmatpush.bf16.msra.mxu0 0
    %452 = vmatpush.bf16.msra.mxu0 0
    %453 = vmatpush.bf16.msra.mxu0 0
    %454 = vmatpush.bf16.msra.mxu0 0
    %455 = vmatpush.bf16.msra.mxu0 0
    %456 = vmatpush.bf16.msra.mxu0 0
    %457 = vmatpush.bf16.msra.mxu0 0
    %458 = vmatpush.bf16.msra.mxu0 %v449
    %459 = vmatmul.bf16.gmra.mxu0 %v446
    %v460 = vpop.f32.mrf.mxu0
    %v461 = vadd.f32 0.0, %v460
    %v462 = vpop.f32.mrf.mxu0
    %463 = vdwg.mxu0
    %v464 = vpack.c.bf16 %v461, %v461
    %v466 = vsel %vm192, %v464, 0
    %468 = vmatpush.bf16.msra.mxu0 0
    %469 = vmatpush.bf16.msra.mxu0 0
    %470 = vmatpush.bf16.msra.mxu0 0
    %471 = vmatpush.bf16.msra.mxu0 0
    %472 = vmatpush.bf16.msra.mxu0 0
    %473 = vmatpush.bf16.msra.mxu0 0
    %474 = vmatpush.bf16.msra.mxu0 0
    %475 = vmatpush.bf16.msra.mxu0 %v309
    %476 = vmatmul.bf16.gmra.mxu0 %v466
    %v477 = vpop.f32.mrf.mxu0
    %v478 = vadd.f32 0.0, %v477
    %v479 = vpop.f32.mrf.mxu0
    %480 = vdwg.mxu0
    %v482 = vsel %vm192, %v407, 0
    %484 = vmatpush.bf16.msra.mxu0 0
    %485 = vmatpush.bf16.msra.mxu0 0
    %486 = vmatpush.bf16.msra.mxu0 0
    %487 = vmatpush.bf16.msra.mxu0 0
    %488 = vmatpush.bf16.msra.mxu0 0
    %489 = vmatpush.bf16.msra.mxu0 0
    %490 = vmatpush.bf16.msra.mxu0 0
    %491 = vmatpush.bf16.msra.mxu0 %v331
    %492 = vmatmul.bf16.gmra.mxu0 %v482
    %v493 = vpop.f32.mrf.mxu0
    %v494 = vadd.f32 %v478, %v493
    %v495 = vpop.f32.mrf.mxu0
    %496 = vdwg.mxu0
    %497 = vst.msk [vmem:[#allocation2 + $0x8] sm:$0xff] %vm65, %v494
    %v498 = vld [vmem:[#allocation2] sm:$0xff]
    %v499 = vld [vmem:[#allocation2 + $0x8] sm:$0xff]
    %v500 = vld [vmem:[%s7] sm:$0x1]
    %v502 = vperm.slane %v500, 0
    %v504 = vadd.f32 %v498, %v502
    %v505 = vadd.f32 %v499, %v502
    %v506 = vadd.f32 %v504, %v125
    %v507 = vadd.f32 %v505, %v126
    %v508 = vld [vmem:[%s8] sm:$0x1]
    %v509 = vld [vmem:[%s9] sm:$0x1]
    %v510 = vsel %vm65, %v506, 0.0
    %511 = vadd.xlane.f32.xlu0 %v510
    %v512 = vpop.xlane.xlu0 %511
    %v513 = vsel %vm65, %v507, 0.0
    %514 = vadd.xlane.f32.xlu0 %v513
    %v515 = vpop.xlane.xlu0 %514
    %v516 = vmul.f32 %v512, %v78
    %v517 = vmul.f32 %v515, %v78
    %v518 = vsub.f32 %v506, %v516
    %v519 = vsub.f32 %v507, %v517
    %v520 = vmul.f32 %v518, %v518
    %v521 = vmul.f32 %v519, %v519
    %v522 = vsel %vm65, %v520, 0.0
    %523 = vadd.xlane.f32.xlu0 %v522
    %v524 = vpop.xlane.xlu0 %523
    %v525 = vsel %vm65, %v521, 0.0
    %526 = vadd.xlane.f32.xlu0 %v525
    %v527 = vpop.xlane.xlu0 %526
    %v528 = vmul.f32 %v524, %v78
    %v529 = vmul.f32 %v527, %v78
    %v530 = vadd.f32 %v528, 1e-05
    %v531 = vadd.f32 %v529, 1e-05
    %v532 = vrsqrt.pop %v530
    %v533 = vmul.f32 %v532, %v530
    %v534 = vmul.f32 %v533, %v532
    %v535 = vmul.f32 0.5, %v534
    %v536 = vsub.f32 1.5, %v535
    %v537 = vmul.f32 %v532, %v536
    %vm538 = vweird.f32 %v530
    %vm539 = vweird.f32 %v532
    %vm540 = vmor %vm538, %vm539
    %v541 = vsel %vm540, %v532, %v537
    %v542 = vrsqrt.pop %v531
    %v543 = vmul.f32 %v542, %v531
    %v544 = vmul.f32 %v543, %v542
    %v545 = vmul.f32 0.5, %v544
    %v546 = vsub.f32 1.5, %v545
    %v547 = vmul.f32 %v542, %v546
    %vm548 = vweird.f32 %v531
    %vm549 = vweird.f32 %v542
    %vm550 = vmor %vm548, %vm549
    %v551 = vsel %vm550, %v542, %v547
    %v552 = vmul.f32 %v518, %v541
    %v553 = vmul.f32 %v519, %v551
    %v555 = vperm.slane %v508, 0
    %v557 = vmul.f32 %v552, %v555
    %v558 = vmul.f32 %v553, %v555
    %v560 = vperm.slane %v509, 0
    %v562 = vadd.f32 %v557, %v560
    %v563 = vadd.f32 %v558, %v560
    %v564 = vpack.c.bf16 %v563, %v562
    %v565 = vld [vmem:[%s11] sm:$0x1]
    %v567 = vperm.slane %v565, 0
    %v573 = vunpack.c.l.b16 %v139
    %v574 = vunpack.c.l.b16 %v140
    %v575 = vunpack.c.l.b16 %v141
    %v576 = vunpack.c.l.b16 %v142
    %v577 = vpack.c.b16 %v574, %v573
    %v578 = vpack.c.b16 %v576, %v575
    %v582 = vsel %vm65, %v564, 0
    %584 = vmatpush.bf16.msra.mxu0 0
    %585 = vmatpush.bf16.msra.mxu0 0
    %586 = vmatpush.bf16.msra.mxu0 0
    %587 = vmatpush.bf16.msra.mxu0 0
    %588 = vmatpush.bf16.msra.mxu0 0
    %589 = vmatpush.bf16.msra.mxu0 0
    %590 = vmatpush.bf16.msra.mxu0 %v578
    %591 = vmatpush.bf16.msra.mxu0 %v577
    %592 = vmatmul.bf16.gmra.mxu0 %v582
    %v593 = vpop.f32.mrf.mxu0
    %v594 = vadd.f32 %v567, %v593
    %v595 = vpop.f32.mrf.mxu0
    %v596 = vadd.f32 %v567, %v595
    %597 = vdwg.mxu0
    %v598 = vmul.f32 %v594, 0.5
    %v599 = vmul.f32 %v596, 0.5
    %v600 = vmul.f32 %v594, 0.044715
    %v601 = vmul.f32 %v596, 0.044715
    %v602 = vmul.f32 %v600, %v594
    %v603 = vmul.f32 %v601, %v596
    %v604 = vmul.f32 %v602, %v594
    %v605 = vmul.f32 %v603, %v596
    %v606 = vadd.f32 %v594, %v604
    %v607 = vadd.f32 %v596, %v605
    %v608 = vmul.f32 %v606, 0.7978846
    %v609 = vmul.f32 %v607, 0.7978846
    %v610 = vtanh.pop %v608
    %v611 = vtanh.pop %v609
    %v612 = vadd.f32 %v610, 1.0
    %v613 = vadd.f32 %v611, 1.0
    %v614 = vmul.f32 %v598, %v612
    %v615 = vmul.f32 %v599, %v613
    %v616 = vpack.c.bf16 %v615, %v614
    %v617 = vld [vmem:[%s13] sm:$0x1]
    %v619 = vperm.slane %v617, 0
    %v629 = vunpack.c.l.b16 %v143
    %v630 = vunpack.c.l.b16 %v144
    %v631 = vunpack.c.l.b16 %v145
    %v632 = vunpack.c.l.b16 %v146
    %v633 = vunpack.c.l.b16 %v147
    %v634 = vunpack.c.l.b16 %v148
    %v635 = vunpack.c.l.b16 %v149
    %v636 = vunpack.c.l.b16 %v150
    %v637 = vpack.c.b16 %v630, %v629
    %v638 = vpack.c.b16 %v632, %v631
    %v639 = vpack.c.b16 %v634, %v633
    %v640 = vpack.c.b16 %v636, %v635
    %vm645 = vcmask 523264
    %v647 = vsel %vm645, %v616, 0
    %649 = vmatpush.bf16.msra.mxu0 0
    %650 = vmatpush.bf16.msra.mxu0 0
    %651 = vmatpush.bf16.msra.mxu0 0
    %652 = vmatpush.bf16.msra.mxu0 0
    %653 = vmatpush.bf16.msra.mxu0 %v640
    %654 = vmatpush.bf16.msra.mxu0 %v639
    %655 = vmatpush.bf16.msra.mxu0 %v638
    %656 = vmatpush.bf16.msra.mxu0 %v637
    %657 = vmatmul.bf16.gmra.mxu0 %v647
    %v658 = vpop.f32.mrf.mxu0
    %v659 = vadd.f32 %v619, %v658
    %v660 = vpop.f32.mrf.mxu0
    %v661 = vadd.f32 %v619, %v660
    %662 = vdwg.mxu0
    %v663 = vadd.f32 %v659, %v562
    %v664 = vadd.f32 %v661, %v563
    %v665 = vld [vmem:[%s14] sm:$0x1]
    %v666 = vld [vmem:[%s15] sm:$0x1]
    %v667 = vsel %vm65, %v663, 0.0
    %668 = vadd.xlane.f32.xlu0 %v667
    %v669 = vpop.xlane.xlu0 %668
    %v670 = vsel %vm65, %v664, 0.0
    %671 = vadd.xlane.f32.xlu0 %v670
    %v672 = vpop.xlane.xlu0 %671
    %v673 = vmul.f32 %v669, %v78
    %v674 = vmul.f32 %v672, %v78
    %v675 = vsub.f32 %v663, %v673
    %v676 = vsub.f32 %v664, %v674
    %v677 = vmul.f32 %v675, %v675
    %v678 = vmul.f32 %v676, %v676
    %v679 = vsel %vm65, %v677, 0.0
    %680 = vadd.xlane.f32.xlu0 %v679
    %v681 = vpop.xlane.xlu0 %680
    %v682 = vsel %vm65, %v678, 0.0
    %683 = vadd.xlane.f32.xlu0 %v682
    %v684 = vpop.xlane.xlu0 %683
    %v685 = vmul.f32 %v681, %v78
    %v686 = vmul.f32 %v684, %v78
    %v687 = vadd.f32 %v685, 1e-05
    %v688 = vadd.f32 %v686, 1e-05
    %v689 = vrsqrt.pop %v687
    %v690 = vmul.f32 %v689, %v687
    %v691 = vmul.f32 %v690, %v689
    %v692 = vmul.f32 0.5, %v691
    %v693 = vsub.f32 1.5, %v692
    %v694 = vmul.f32 %v689, %v693
    %vm695 = vweird.f32 %v687
    %vm696 = vweird.f32 %v689
    %vm697 = vmor %vm695, %vm696
    %v698 = vsel %vm697, %v689, %v694
    %v699 = vrsqrt.pop %v688
    %v700 = vmul.f32 %v699, %v688
    %v701 = vmul.f32 %v700, %v699
    %v702 = vmul.f32 0.5, %v701
    %v703 = vsub.f32 1.5, %v702
    %v704 = vmul.f32 %v699, %v703
    %vm705 = vweird.f32 %v688
    %vm706 = vweird.f32 %v699
    %vm707 = vmor %vm705, %vm706
    %v708 = vsel %vm707, %v699, %v704
    %v709 = vmul.f32 %v675, %v698
    %v710 = vmul.f32 %v676, %v708
    %v712 = vperm.slane %v665, 0
    %v714 = vmul.f32 %v709, %v712
    %v715 = vmul.f32 %v710, %v712
    %v717 = vperm.slane %v666, 0
    %v719 = vadd.f32 %v714, %v717
    %v720 = vadd.f32 %v715, %v717
    %s721 = scalar_lea.vmem %s4, 16
    %v722 = vld [vmem:[%s721] sm:$0xf]
    %v723 = vld [vmem:[%s721 + $0x4] sm:$0xf]
    %v724 = vld [vmem:[%s721 + $0x8] sm:$0xf]
    %v725 = vld [vmem:[%s721 + $0xc] sm:$0xf]
    %s726 = scalar_lea.vmem %s6, 16
    %v727 = vld [vmem:[%s726] sm:$0xf]
    %v728 = vld [vmem:[%s726 + $0x4] sm:$0xf]
    %v729 = vld [vmem:[%s726 + $0x8] sm:$0xf]
    %v730 = vld [vmem:[%s726 + $0xc] sm:$0xf]
    %s731 = scalar_lea.vmem %s10, 16
    %v732 = vld [vmem:[%s731] sm:$0xf]
    %v733 = vld [vmem:[%s731 + $0x4] sm:$0xf]
    %v734 = vld [vmem:[%s731 + $0x8] sm:$0xf]
    %v735 = vld [vmem:[%s731 + $0xc] sm:$0xf]
    %s736 = scalar_lea.vmem %s12, 32
    %v737 = vld [vmem:[%s736] sm:$0xf]
    %v738 = vld [vmem:[%s736 + $0x4] sm:$0xf]
    %v739 = vld [vmem:[%s736 + $0x8] sm:$0xf]
    %v740 = vld [vmem:[%s736 + $0xc] sm:$0xf]
    %v741 = vld [vmem:[%s736 + $0x10] sm:$0xf]
    %v742 = vld [vmem:[%s736 + $0x14] sm:$0xf]
    %v743 = vld [vmem:[%s736 + $0x18] sm:$0xf]
    %v744 = vld [vmem:[%s736 + $0x1c] sm:$0xf]
    %v745 = vpack.c.bf16 %v720, %v719
    %s746 = scalar_lea.vmem %s5, 1
    %v747 = vld [vmem:[%s746] sm:$0x1]
    %v749 = vperm.slane %v747, 0
    %v755 = vunpack.c.l.b16 %v722
    %v756 = vunpack.c.l.b16 %v723
    %v757 = vunpack.c.l.b16 %v724
    %v758 = vunpack.c.l.b16 %v725
    %v759 = vpack.c.b16 %v756, %v755
    %v760 = vpack.c.b16 %v758, %v757
    %v764 = vsel %vm65, %v745, 0
    %766 = vmatpush.bf16.msra.mxu0 0
    %767 = vmatpush.bf16.msra.mxu0 0
    %768 = vmatpush.bf16.msra.mxu0 0
    %769 = vmatpush.bf16.msra.mxu0 0
    %770 = vmatpush.bf16.msra.mxu0 0
    %771 = vmatpush.bf16.msra.mxu0 0
    %772 = vmatpush.bf16.msra.mxu0 %v760
    %773 = vmatpush.bf16.msra.mxu0 %v759
    %774 = vmatmul.bf16.gmra.mxu0 %v764
    %v775 = vpop.f32.mrf.mxu0
    %v776 = vadd.f32 %v749, %v775
    %v777 = vpop.f32.mrf.mxu0
    %v778 = vadd.f32 %v749, %v777
    %779 = vdwg.mxu0
    %v780 = vpack.c.bf16 %v776, %v776
    %v781 = vpack.c.bf16 %v778, %v778
    %v783 = vunpack.c.l.b16 %v780
    %v784 = vpack.c.b16 %v783, %v783
    %785 = vrot.lane.b32.xlu0 %v784, 96
    %v786 = vpop.permute.xlu0 %785
    %v788 = vsel %vm192, %v780, 0
    %v791 = vsel %vm192, %v786, 0
    %793 = vmatpush.bf16.xpose.msra.mxu0 0
    %794 = vmatpush.bf16.xpose.msra.mxu0 0
    %795 = vmatpush.bf16.xpose.msra.mxu0 0
    %796 = vmatpush.bf16.xpose.msra.mxu0 0
    %797 = vmatpush.bf16.xpose.msra.mxu0 0
    %798 = vmatpush.bf16.xpose.msra.mxu0 0
    %799 = vmatpush.bf16.xpose.msra.mxu0 0
    %800 = vmatpush.bf16.xpose.msra.mxu0 %v791
    %801 = vmatmul.bf16.gmra.mxu0 %v788
    %v802 = vpop.f32.mrf.mxu0
    %v803 = vadd.f32 %v128, %v802
    %v804 = vpop.f32.mrf.mxu0
    %805 = vdwg.mxu0
    %v806 = vsel %vm212, %v803, -inf
    %807 = vmax.xlane.f32.xlu0 %v806
    %v808 = vpop.xlane.xlu0 %807
    %v809 = vsub.f32 %v803, %v808
    %v810 = vmul.f32 %v809, 1.442695
    %v811 = vpow.pop %v810
    %v812 = vsel %vm212, %v811, 0.0
    %813 = vadd.xlane.f32.xlu0 %v812
    %v814 = vpop.xlane.xlu0 %813
    %v815 = vrcp.pop %v814
    %v816 = vmul.f32 %v811, %v815
    %v817 = vpack.c.bf16 %v816, %v816
    %818 = vrot.lane.b32.xlu0 %v784, 64
    %v819 = vpop.permute.xlu0 %818
    %v821 = vsel %vm212, %v817, 0
    %v824 = vsel %vm230, %v819, 0
    %826 = vmatpush.bf16.msra.mxu0 0
    %827 = vmatpush.bf16.msra.mxu0 0
    %828 = vmatpush.bf16.msra.mxu0 0
    %829 = vmatpush.bf16.msra.mxu0 0
    %830 = vmatpush.bf16.msra.mxu0 0
    %831 = vmatpush.bf16.msra.mxu0 0
    %832 = vmatpush.bf16.msra.mxu0 0
    %833 = vmatpush.bf16.msra.mxu0 %v824
    %834 = vmatmul.bf16.gmra.mxu0 %v821
    %v835 = vpop.f32.mrf.mxu0
    %v836 = vadd.f32 0.0, %v835
    %v837 = vpop.f32.mrf.mxu0
    %838 = vdwg.mxu0
    %v839 = vpack.c.bf16 %v836, %v836
    %840 = vrot.lane.b32.xlu0 %v784, 112
    %v841 = vpop.permute.xlu0 %840
    %842 = vrot.lane.b32.xlu0 %v784, 80
    %v843 = vpop.permute.xlu0 %842
    %v845 = vsel %vm192, %v841, 0
    %v848 = vsel %vm192, %v843, 0
    %850 = vmatpush.bf16.xpose.msra.mxu0 0
    %851 = vmatpush.bf16.xpose.msra.mxu0 0
    %852 = vmatpush.bf16.xpose.msra.mxu0 0
    %853 = vmatpush.bf16.xpose.msra.mxu0 0
    %854 = vmatpush.bf16.xpose.msra.mxu0 0
    %855 = vmatpush.bf16.xpose.msra.mxu0 0
    %856 = vmatpush.bf16.xpose.msra.mxu0 0
    %857 = vmatpush.bf16.xpose.msra.mxu0 %v848
    %858 = vmatmul.bf16.gmra.mxu0 %v845
    %v859 = vpop.f32.mrf.mxu0
    %v860 = vadd.f32 %v128, %v859
    %v861 = vpop.f32.mrf.mxu0
    %862 = vdwg.mxu0
    %v863 = vsel %vm212, %v860, -inf
    %864 = vmax.xlane.f32.xlu0 %v863
    %v865 = vpop.xlane.xlu0 %864
    %v866 = vsub.f32 %v860, %v865
    %v867 = vmul.f32 %v866, 1.442695
    %v868 = vpow.pop %v867
    %v869 = vsel %vm212, %v868, 0.0
    %870 = vadd.xlane.f32.xlu0 %v869
    %v871 = vpop.xlane.xlu0 %870
    %v872 = vrcp.pop %v871
    %v873 = vmul.f32 %v868, %v872
    %v874 = vpack.c.bf16 %v873, %v873
    %875 = vrot.lane.b32.xlu0 %v784, 48
    %v876 = vpop.permute.xlu0 %875
    %v878 = vsel %vm212, %v874, 0
    %v881 = vsel %vm230, %v876, 0
    %883 = vmatpush.bf16.msra.mxu0 0
    %884 = vmatpush.bf16.msra.mxu0 0
    %885 = vmatpush.bf16.msra.mxu0 0
    %886 = vmatpush.bf16.msra.mxu0 0
    %887 = vmatpush.bf16.msra.mxu0 0
    %888 = vmatpush.bf16.msra.mxu0 0
    %889 = vmatpush.bf16.msra.mxu0 0
    %890 = vmatpush.bf16.msra.mxu0 %v881
    %891 = vmatmul.bf16.gmra.mxu0 %v878
    %v892 = vpop.f32.mrf.mxu0
    %v893 = vadd.f32 0.0, %v892
    %v894 = vpop.f32.mrf.mxu0
    %895 = vdwg.mxu0
    %v896 = vpack.c.bf16 %v893, %v893
    %v899 = vunpack.c.l.b16 %v729
    %v900 = vunpack.c.l.b16 %v730
    %v901 = vpack.c.b16 %v900, %v899
    %v904 = vsel %vm192, %v896, 0
    %906 = vmatpush.bf16.msra.mxu0 0
    %907 = vmatpush.bf16.msra.mxu0 0
    %908 = vmatpush.bf16.msra.mxu0 0
    %909 = vmatpush.bf16.msra.mxu0 0
    %910 = vmatpush.bf16.msra.mxu0 0
    %911 = vmatpush.bf16.msra.mxu0 0
    %912 = vmatpush.bf16.msra.mxu0 0
    %913 = vmatpush.bf16.msra.mxu0 %v901
    %914 = vmatmul.bf16.gmra.mxu0 %v904
    %v915 = vpop.f32.mrf.mxu0
    %v916 = vadd.f32 0.0, %v915
    %v917 = vpop.f32.mrf.mxu0
    %918 = vdwg.mxu0
    %v921 = vunpack.c.l.b16 %v727
    %v922 = vunpack.c.l.b16 %v728
    %v923 = vpack.c.b16 %v922, %v921
    %v926 = vsel %vm192, %v839, 0
    %928 = vmatpush.bf16.msra.mxu0 0
    %929 = vmatpush.bf16.msra.mxu0 0
    %930 = vmatpush.bf16.msra.mxu0 0
    %931 = vmatpush.bf16.msra.mxu0 0
    %932 = vmatpush.bf16.msra.mxu0 0
    %933 = vmatpush.bf16.msra.mxu0 0
    %934 = vmatpush.bf16.msra.mxu0 0
    %935 = vmatpush.bf16.msra.mxu0 %v923
    %936 = vmatmul.bf16.gmra.mxu0 %v926
    %v937 = vpop.f32.mrf.mxu0
    %v938 = vadd.f32 %v916, %v937
    %v939 = vpop.f32.mrf.mxu0
    %940 = vdwg.mxu0
    %941 = vst.msk [vmem:[#allocation2] sm:$0xff] %vm65, %v938
    %v943 = vunpack.c.l.b16 %v781
    %v944 = vpack.c.b16 %v943, %v943
    %945 = vrot.lane.b32.xlu0 %v944, 96
    %v946 = vpop.permute.xlu0 %945
    %v948 = vsel %vm192, %v781, 0
    %v951 = vsel %vm192, %v946, 0
    %953 = vmatpush.bf16.xpose.msra.mxu0 0
    %954 = vmatpush.bf16.xpose.msra.mxu0 0
    %955 = vmatpush.bf16.xpose.msra.mxu0 0
    %956 = vmatpush.bf16.xpose.msra.mxu0 0
    %957 = vmatpush.bf16.xpose.msra.mxu0 0
    %958 = vmatpush.bf16.xpose.msra.mxu0 0
    %959 = vmatpush.bf16.xpose.msra.mxu0 0
    %960 = vmatpush.bf16.xpose.msra.mxu0 %v951
    %961 = vmatmul.bf16.gmra.mxu0 %v948
    %v962 = vpop.f32.mrf.mxu0
    %v963 = vadd.f32 %v130, %v962
    %v964 = vpop.f32.mrf.mxu0
    %965 = vdwg.mxu0
    %v966 = vsel %vm212, %v963, -inf
    %967 = vmax.xlane.f32.xlu0 %v966
    %v968 = vpop.xlane.xlu0 %967
    %v969 = vsub.f32 %v963, %v968
    %v970 = vmul.f32 %v969, 1.442695
    %v971 = vpow.pop %v970
    %v972 = vsel %vm212, %v971, 0.0
    %973 = vadd.xlane.f32.xlu0 %v972
    %v974 = vpop.xlane.xlu0 %973
    %v975 = vrcp.pop %v974
    %v976 = vmul.f32 %v971, %v975
    %v977 = vpack.c.bf16 %v976, %v976
    %978 = vrot.lane.b32.xlu0 %v944, 64
    %v979 = vpop.permute.xlu0 %978
    %v981 = vsel %vm212, %v977, 0
    %v984 = vsel %vm230, %v979, 0
    %986 = vmatpush.bf16.msra.mxu0 0
    %987 = vmatpush.bf16.msra.mxu0 0
    %988 = vmatpush.bf16.msra.mxu0 0
    %989 = vmatpush.bf16.msra.mxu0 0
    %990 = vmatpush.bf16.msra.mxu0 0
    %991 = vmatpush.bf16.msra.mxu0 0
    %992 = vmatpush.bf16.msra.mxu0 0
    %993 = vmatpush.bf16.msra.mxu0 %v984
    %994 = vmatmul.bf16.gmra.mxu0 %v981
    %v995 = vpop.f32.mrf.mxu0
    %v996 = vadd.f32 0.0, %v995
    %v997 = vpop.f32.mrf.mxu0
    %998 = vdwg.mxu0
    %v999 = vpack.c.bf16 %v996, %v996
    %1000 = vrot.lane.b32.xlu0 %v944, 112
    %v1001 = vpop.permute.xlu0 %1000
    %1002 = vrot.lane.b32.xlu0 %v944, 80
    %v1003 = vpop.permute.xlu0 %1002
    %v1005 = vsel %vm192, %v1001, 0
    %v1008 = vsel %vm192, %v1003, 0
    %1010 = vmatpush.bf16.xpose.msra.mxu0 0
    %1011 = vmatpush.bf16.xpose.msra.mxu0 0
    %1012 = vmatpush.bf16.xpose.msra.mxu0 0
    %1013 = vmatpush.bf16.xpose.msra.mxu0 0
    %1014 = vmatpush.bf16.xpose.msra.mxu0 0
    %1015 = vmatpush.bf16.xpose.msra.mxu0 0
    %1016 = vmatpush.bf16.xpose.msra.mxu0 0
    %1017 = vmatpush.bf16.xpose.msra.mxu0 %v1008
    %1018 = vmatmul.bf16.gmra.mxu0 %v1005
    %v1019 = vpop.f32.mrf.mxu0
    %v1020 = vadd.f32 %v130, %v1019
    %v1021 = vpop.f32.mrf.mxu0
    %1022 = vdwg.mxu0
    %v1023 = vsel %vm212, %v1020, -inf
    %1024 = vmax.xlane.f32.xlu0 %v1023
    %v1025 = vpop.xlane.xlu0 %1024
    %v1026 = vsub.f32 %v1020, %v1025
    %v1027 = vmul.f32 %v1026, 1.442695
    %v1028 = vpow.pop %v1027
    %v1029 = vsel %vm212, %v1028, 0.0
    %1030 = vadd.xlane.f32.xlu0 %v1029
    %v1031 = vpop.xlane.xlu0 %1030
    %v1032 = vrcp.pop %v1031
    %v1033 = vmul.f32 %v1028, %v1032
    %v1034 = vpack.c.bf16 %v1033, %v1033
    %1035 = vrot.lane.b32.xlu0 %v944, 48
    %v1036 = vpop.permute.xlu0 %1035
    %v1038 = vsel %vm212, %v1034, 0
    %v1041 = vsel %vm230, %v1036, 0
    %1043 = vmatpush.bf16.msra.mxu0 0
    %1044 = vmatpush.bf16.msra.mxu0 0
    %1045 = vmatpush.bf16.msra.mxu0 0
    %1046 = vmatpush.bf16.msra.mxu0 0
    %1047 = vmatpush.bf16.msra.mxu0 0
    %1048 = vmatpush.bf16.msra.mxu0 0
    %1049 = vmatpush.bf16.msra.mxu0 0
    %1050 = vmatpush.bf16.msra.mxu0 %v1041
    %1051 = vmatmul.bf16.gmra.mxu0 %v1038
    %v1052 = vpop.f32.mrf.mxu0
    %v1053 = vadd.f32 0.0, %v1052
    %v1054 = vpop.f32.mrf.mxu0
    %1055 = vdwg.mxu0
    %v1056 = vpack.c.bf16 %v1053, %v1053
    %v1058 = vsel %vm192, %v1056, 0
    %1060 = vmatpush.bf16.msra.mxu0 0
    %1061 = vmatpush.bf16.msra.mxu0 0
    %1062 = vmatpush.bf16.msra.mxu0 0
    %1063 = vmatpush.bf16.msra.mxu0 0
    %1064 = vmatpush.bf16.msra.mxu0 0
    %1065 = vmatpush.bf16.msra.mxu0 0
    %1066 = vmatpush.bf16.msra.mxu0 0
    %1067 = vmatpush.bf16.msra.mxu0 %v901
    %1068 = vmatmul.bf16.gmra.mxu0 %v1058
    %v1069 = vpop.f32.mrf.mxu0
    %v1070 = vadd.f32 0.0, %v1069
    %v1071 = vpop.f32.mrf.mxu0
    %1072 = vdwg.mxu0
    %v1074 = vsel %vm192, %v999, 0
    %1076 = vmatpush.bf16.msra.mxu0 0
    %1077 = vmatpush.bf16.msra.mxu0 0
    %1078 = vmatpush.bf16.msra.mxu0 0
    %1079 = vmatpush.bf16.msra.mxu0 0
    %1080 = vmatpush.bf16.msra.mxu0 0
    %1081 = vmatpush.bf16.msra.mxu0 0
    %1082 = vmatpush.bf16.msra.mxu0 0
    %1083 = vmatpush.bf16.msra.mxu0 %v923
    %1084 = vmatmul.bf16.gmra.mxu0 %v1074
    %v1085 = vpop.f32.mrf.mxu0
    %v1086 = vadd.f32 %v1070, %v1085
    %v1087 = vpop.f32.mrf.mxu0
    %1088 = vdwg.mxu0
    %1089 = vst.msk [vmem:[#allocation2 + $0x8] sm:$0xff] %vm65, %v1086
    %v1090 = vld [vmem:[#allocation2] sm:$0xff]
    %v1091 = vld [vmem:[#allocation2 + $0x8] sm:$0xff]
    %s1092 = scalar_lea.vmem %s7, 1
    %v1093 = vld [vmem:[%s1092] sm:$0x1]
    %v1095 = vperm.slane %v1093, 0
    %v1097 = vadd.f32 %v1090, %v1095
    %v1098 = vadd.f32 %v1091, %v1095
    %v1099 = vadd.f32 %v1097, %v719
    %v1100 = vadd.f32 %v1098, %v720
    %s1101 = scalar_lea.vmem %s8, 1
    %v1102 = vld [vmem:[%s1101] sm:$0x1]
    %s1103 = scalar_lea.vmem %s9, 1
    %v1104 = vld [vmem:[%s1103] sm:$0x1]
    %v1105 = vsel %vm65, %v1099, 0.0
    %1106 = vadd.xlane.f32.xlu0 %v1105
    %v1107 = vpop.xlane.xlu0 %1106
    %v1108 = vsel %vm65, %v1100, 0.0
    %1109 = vadd.xlane.f32.xlu0 %v1108
    %v1110 = vpop.xlane.xlu0 %1109
    %v1111 = vmul.f32 %v1107, %v78
    %v1112 = vmul.f32 %v1110, %v78
    %v1113 = vsub.f32 %v1099, %v1111
    %v1114 = vsub.f32 %v1100, %v1112
    %v1115 = vmul.f32 %v1113, %v1113
    %v1116 = vmul.f32 %v1114, %v1114
    %v1117 = vsel %vm65, %v1115, 0.0
    %1118 = vadd.xlane.f32.xlu0 %v1117
    %v1119 = vpop.xlane.xlu0 %1118
    %v1120 = vsel %vm65, %v1116, 0.0
    %1121 = vadd.xlane.f32.xlu0 %v1120
    %v1122 = vpop.xlane.xlu0 %1121
    %v1123 = vmul.f32 %v1119, %v78
    %v1124 = vmul.f32 %v1122, %v78
    %v1125 = vadd.f32 %v1123, 1e-05
    %v1126 = vadd.f32 %v1124, 1e-05
    %v1127 = vrsqrt.pop %v1125
    %v1128 = vmul.f32 %v1127, %v1125
    %v1129 = vmul.f32 %v1128, %v1127
    %v1130 = vmul.f32 0.5, %v1129
    %v1131 = vsub.f32 1.5, %v1130
    %v1132 = vmul.f32 %v1127, %v1131
    %vm1133 = vweird.f32 %v1125
    %vm1134 = vweird.f32 %v1127
    %vm1135 = vmor %vm1133, %vm1134
    %v1136 = vsel %vm1135, %v1127, %v1132
    %v1137 = vrsqrt.pop %v1126
    %v1138 = vmul.f32 %v1137, %v1126
    %v1139 = vmul.f32 %v1138, %v1137
    %v1140 = vmul.f32 0.5, %v1139
    %v1141 = vsub.f32 1.5, %v1140
    %v1142 = vmul.f32 %v1137, %v1141
    %vm1143 = vweird.f32 %v1126
    %vm1144 = vweird.f32 %v1137
    %vm1145 = vmor %vm1143, %vm1144
    %v1146 = vsel %vm1145, %v1137, %v1142
    %v1147 = vmul.f32 %v1113, %v1136
    %v1148 = vmul.f32 %v1114, %v1146
    %v1150 = vperm.slane %v1102, 0
    %v1152 = vmul.f32 %v1147, %v1150
    %v1153 = vmul.f32 %v1148, %v1150
    %v1155 = vperm.slane %v1104, 0
    %v1157 = vadd.f32 %v1152, %v1155
    %v1158 = vadd.f32 %v1153, %v1155
    %v1159 = vpack.c.bf16 %v1158, %v1157
    %s1160 = scalar_lea.vmem %s11, 1
    %v1161 = vld [vmem:[%s1160] sm:$0x1]
    %v1163 = vperm.slane %v1161, 0
    %v1169 = vunpack.c.l.b16 %v732
    %v1170 = vunpack.c.l.b16 %v733
    %v1171 = vunpack.c.l.b16 %v734
    %v1172 = vunpack.c.l.b16 %v735
    %v1173 = vpack.c.b16 %v1170, %v1169
    %v1174 = vpack.c.b16 %v1172, %v1171
    %v1178 = vsel %vm65, %v1159, 0
    %1180 = vmatpush.bf16.msra.mxu0 0
    %1181 = vmatpush.bf16.msra.mxu0 0
    %1182 = vmatpush.bf16.msra.mxu0 0
    %1183 = vmatpush.bf16.msra.mxu0 0
    %1184 = vmatpush.bf16.msra.mxu0 0
    %1185 = vmatpush.bf16.msra.mxu0 0
    %1186 = vmatpush.bf16.msra.mxu0 %v1174
    %1187 = vmatpush.bf16.msra.mxu0 %v1173
    %1188 = vmatmul.bf16.gmra.mxu0 %v1178
    %v1189 = vpop.f32.mrf.mxu0
    %v1190 = vadd.f32 %v1163, %v1189
    %v1191 = vpop.f32.mrf.mxu0
    %v1192 = vadd.f32 %v1163, %v1191
    %1193 = vdwg.mxu0
    %v1194 = vmul.f32 %v1190, 0.5
    %v1195 = vmul.f32 %v1192, 0.5
    %v1196 = vmul.f32 %v1190, 0.044715
    %v1197 = vmul.f32 %v1192, 0.044715
    %v1198 = vmul.f32 %v1196, %v1190
    %v1199 = vmul.f32 %v1197, %v1192
    %v1200 = vmul.f32 %v1198, %v1190
    %v1201 = vmul.f32 %v1199, %v1192
    %v1202 = vadd.f32 %v1190, %v1200
    %v1203 = vadd.f32 %v1192, %v1201
    %v1204 = vmul.f32 %v1202, 0.7978846
    %v1205 = vmul.f32 %v1203, 0.7978846
    %v1206 = vtanh.pop %v1204
    %v1207 = vtanh.pop %v1205
    %v1208 = vadd.f32 %v1206, 1.0
    %v1209 = vadd.f32 %v1207, 1.0
    %v1210 = vmul.f32 %v1194, %v1208
    %v1211 = vmul.f32 %v1195, %v1209
    %v1212 = vpack.c.bf16 %v1211, %v1210
    %s1213 = scalar_lea.vmem %s13, 1
    %v1214 = vld [vmem:[%s1213] sm:$0x1]
    %v1216 = vperm.slane %v1214, 0
    %v1226 = vunpack.c.l.b16 %v737
    %v1227 = vunpack.c.l.b16 %v738
    %v1228 = vunpack.c.l.b16 %v739
    %v1229 = vunpack.c.l.b16 %v740
    %v1230 = vunpack.c.l.b16 %v741
    %v1231 = vunpack.c.l.b16 %v742
    %v1232 = vunpack.c.l.b16 %v743
    %v1233 = vunpack.c.l.b16 %v744
    %v1234 = vpack.c.b16 %v1227, %v1226
    %v1235 = vpack.c.b16 %v1229, %v1228
    %v1236 = vpack.c.b16 %v1231, %v1230
    %v1237 = vpack.c.b16 %v1233, %v1232
    %v1243 = vsel %vm645, %v1212, 0
    %1245 = vmatpush.bf16.msra.mxu0 0
    %1246 = vmatpush.bf16.msra.mxu0 0
    %1247 = vmatpush.bf16.msra.mxu0 0
    %1248 = vmatpush.bf16.msra.mxu0 0
    %1249 = vmatpush.bf16.msra.mxu0 %v1237
    %1250 = vmatpush.bf16.msra.mxu0 %v1236
    %1251 = vmatpush.bf16.msra.mxu0 %v1235
    %1252 = vmatpush.bf16.msra.mxu0 %v1234
    %1253 = vmatmul.bf16.gmra.mxu0 %v1243
    %v1254 = vpop.f32.mrf.mxu0
    %v1255 = vadd.f32 %v1216, %v1254
    %v1256 = vpop.f32.mrf.mxu0
    %v1257 = vadd.f32 %v1216, %v1256
    %1258 = vdwg.mxu0
    %v1259 = vadd.f32 %v1255, %v1157
    %v1260 = vadd.f32 %v1257, %v1158
    %s1261 = scalar_lea.vmem %s14, 1
    %v1262 = vld [vmem:[%s1261] sm:$0x1]
    %s1263 = scalar_lea.vmem %s15, 1
    %v1264 = vld [vmem:[%s1263] sm:$0x1]
    %v1265 = vsel %vm65, %v1259, 0.0
    %1266 = vadd.xlane.f32.xlu0 %v1265
    %v1267 = vpop.xlane.xlu0 %1266
    %v1268 = vsel %vm65, %v1260, 0.0
    %1269 = vadd.xlane.f32.xlu0 %v1268
    %v1270 = vpop.xlane.xlu0 %1269
    %v1271 = vmul.f32 %v1267, %v78
    %v1272 = vmul.f32 %v1270, %v78
    %v1273 = vsub.f32 %v1259, %v1271
    %v1274 = vsub.f32 %v1260, %v1272
    %v1275 = vmul.f32 %v1273, %v1273
    %v1276 = vmul.f32 %v1274, %v1274
    %v1277 = vsel %vm65, %v1275, 0.0
    %1278 = vadd.xlane.f32.xlu0 %v1277
    %v1279 = vpop.xlane.xlu0 %1278
    %v1280 = vsel %vm65, %v1276, 0.0
    %1281 = vadd.xlane.f32.xlu0 %v1280
    %v1282 = vpop.xlane.xlu0 %1281
    %v1283 = vmul.f32 %v1279, %v78
    %v1284 = vmul.f32 %v1282, %v78
    %v1285 = vadd.f32 %v1283, 1e-05
    %v1286 = vadd.f32 %v1284, 1e-05
    %v1287 = vrsqrt.pop %v1285
    %v1288 = vmul.f32 %v1287, %v1285
    %v1289 = vmul.f32 %v1288, %v1287
    %v1290 = vmul.f32 0.5, %v1289
    %v1291 = vsub.f32 1.5, %v1290
    %v1292 = vmul.f32 %v1287, %v1291
    %vm1293 = vweird.f32 %v1285
    %vm1294 = vweird.f32 %v1287
    %vm1295 = vmor %vm1293, %vm1294
    %v1296 = vsel %vm1295, %v1287, %v1292
    %v1297 = vrsqrt.pop %v1286
    %v1298 = vmul.f32 %v1297, %v1286
    %v1299 = vmul.f32 %v1298, %v1297
    %v1300 = vmul.f32 0.5, %v1299
    %v1301 = vsub.f32 1.5, %v1300
    %v1302 = vmul.f32 %v1297, %v1301
    %vm1303 = vweird.f32 %v1286
    %vm1304 = vweird.f32 %v1297
    %vm1305 = vmor %vm1303, %vm1304
    %v1306 = vsel %vm1305, %v1297, %v1302
    %v1307 = vmul.f32 %v1273, %v1296
    %v1308 = vmul.f32 %v1274, %v1306
    %v1310 = vperm.slane %v1262, 0
    %v1312 = vmul.f32 %v1307, %v1310
    %v1313 = vmul.f32 %v1308, %v1310
    %v1315 = vperm.slane %v1264, 0
    %v1317 = vadd.f32 %v1312, %v1315
    %v1318 = vadd.f32 %v1313, %v1315
    %v1319 = vld [vmem:[%s16] sm:$0xff]
    %v1320 = vld [vmem:[%s16 + $0x8] sm:$0xff]
    %v1321 = vld [vmem:[%s16 + $0x10] sm:$0xff]
    %v1322 = vld [vmem:[%s16 + $0x18] sm:$0xff]
    %v1323 = vld [vmem:[%s17] sm:$0x1]
    %v1325 = vperm.slane %v1323, 0
    %v1328 = vsel %vm65, %v1317, 0
    %v1331 = vsel %vm65, %v1318, 0
    %1333 = vmatpush.msra.mxu0 0.0
    %1334 = vmatpush.msra.mxu0 0.0
    %1335 = vmatpush.msra.mxu0 0.0
    %1336 = vmatpush.msra.mxu0 0.0
    %1337 = vmatpush.msra.mxu0 0.0
    %1338 = vmatpush.msra.mxu0 0.0
    %1339 = vmatpush.msra.mxu0 0.0
    %1340 = vmatpush.msra.mxu0 0.0
    %1341 = vmatpush.msra.mxu0 0.0
    %1342 = vmatpush.msra.mxu0 0.0
    %1343 = vmatpush.msra.mxu0 0.0
    %1344 = vmatpush.msra.mxu0 0.0
    %1345 = vmatpush.msra.mxu0 %v1322
    %1346 = vmatpush.msra.mxu0 %v1321
    %1347 = vmatpush.msra.mxu0 %v1320
    %1348 = vmatpush.msra.mxu0 %v1319
    %1349 = vmatmul.f32.gmra.mxu0 %v1328
    %v1350 = vpop.f32.mrf.mxu0
    %v1351 = vadd.f32 %v1325, %v1350
    %1352 = vmatmul.f32.gmra.mxu0 %v1331
    %v1353 = vpop.f32.mrf.mxu0
    %v1354 = vadd.f32 %v1325, %v1353
    %1355 = vdwg.mxu0
    %vm1356 = vcmask 8192
    %1357 = vst.msk [vmem:[#allocation3] sm:$0x1] %vm1356, %v1351
    %1358 = vst.msk [vmem:[#allocation3 + $0x1] sm:$0x1] %vm1356, %v1354
    // Predicated region
    $region74: #{sarcasm_classifier_forward.1} parent=1 // pred_check
      _
    $region75: #{sarcasm_classifier_forward.1} parent=1 // pred_check_branch
      %1360 = sbr.rel (0) target = $region77
    $region76: #{sarcasm_classifier_forward.1} parent=1 // pred_region
      %1362 = vsyncadd [#allocation4], 0
      %s1364 = sshll.u32 [#allocation3], 4
      %s1365 = int_to_ptr.vmem [resolvable:$true] %s1364
      %s1366 = sshll.u32 %s18, 4
      %s1367 = int_to_ptr.hbm [resolvable:$true] %s1366
      %1369 = dma.vmem_to_hbm [thread:$0]  %s1365, 32, %s1367, [#allocation4]
    $region77: #{sarcasm_classifier_forward.1} parent=1 // pred_fallthru
      _
    // Predicated region
    $region78: #{sarcasm_classifier_forward.1} parent=1 // pred_check
      _
    $region79: #{sarcasm_classifier_forward.1} parent=1 // pred_check_branch
      %1371 = sbr.rel (0) target = $region81
    $region80: #{sarcasm_classifier_forward.1} parent=1 // pred_region
      %1373 = dma.done [#allocation4], 32
    $region81: #{sarcasm_classifier_forward.1} parent=1 // pred_fallthru
      _
    %1374 = vsyncpa [#allocation4], 1

</llo_original>
